<compile_context>
chip_gen: v5e
topology: v5e:2x2
jax: 0.10.0
libtpu: 0.0.40
codegen_flags: <defaults>
</compile_context>

<pallas_src>
import jax
import jax.numpy as jnp
from jax import lax
from jax.experimental import pallas as pl
from jax.experimental.pallas import tpu as pltpu

IN_DIM = 8 * 8 + 12 + 1                 # 77
PAD_IN = 128                            # 77 -> 128 (lane / MXU aligned)
H1, H2, H3, H4 = 256, 256, 128, 128     # padded hidden dims (real: 200, 200, 100, 50)
DIMS = [IN_DIM, 200, 200, 100, 50, 1]


def mlp_kernel(x_ref,
               w1_ref, b1_ref, w2_ref, b2_ref, w3_ref, b3_ref,
               w4_ref, b4_ref, w5_ref, b5_ref,
               o_ref, xpad_ref):
    tile_b = x_ref.shape[0]

    # Fused input pad (77 -> 128) + f32 -> bf16 cast, done on the VMEM tile.
    xpad_ref[:, :IN_DIM] = x_ref[...]
    xpad_ref[:, IN_DIM:] = jnp.zeros((tile_b, PAD_IN - IN_DIM), jnp.float32)
    h = xpad_ref[...].astype(jnp.bfloat16)                        # (tile_b, 128) bf16

    def layer(h, w_ref, b_ref):
        # bf16 MXU matmul with f32 accumulation; bias-add + ReLU in f32, then repack to bf16.
        z = jnp.dot(h, w_ref[...], preferred_element_type=jnp.float32) + b_ref[...]
        return jnp.maximum(z, 0.0).astype(jnp.bfloat16)

    h = layer(h, w1_ref, b1_ref)        # (tile_b, 256)
    h = layer(h, w2_ref, b2_ref)        # (tile_b, 256)
    h = layer(h, w3_ref, b3_ref)        # (tile_b, 128)
    h = layer(h, w4_ref, b4_ref)        # (tile_b, 128); cols 50.. are exactly zero

    # fc5 (one real output unit): contract on the feature axis with the weight as a row
    # vector so the logits land with BATCH ON THE LANE AXIS: shape (1, tile_b).
    zT = lax.dot_general(w5_ref[...], h,
                         dimension_numbers=(((1,), (1,)), ((), ())),
                         preferred_element_type=jnp.float32) + b5_ref[...]
    # Exact sigmoid on the packed logit vector only (~tile_b values, negligible EUP work).
    o_ref[0] = 1.0 / (1.0 + jnp.exp(-zT))


def _pick_tile_b(batch):
    # Aim for ~4 grid steps (>= 2 pipelined steps per TensorCore on v7x megacore), rounded
    # up to a lane multiple, capped at 1024 for per-step-overhead amortization at large B.
    t = -(-batch // 4)
    t = -(-t // 128) * 128
    return int(max(128, min(1024, t)))


def prepare_params(params):
    """One-time weight prep (hoisted out of the forward path): zero-pad every layer to
    MXU-friendly shapes and cast weights to bf16.  Zero pads are inert through matmul+ReLU."""
    (w1, b1), (w2, b2), (w3, b3), (w4, b4), (w5, b5) = params

    def pad_w(w, pin, pout):
        fi, fo = w.shape
        return jnp.zeros((pin, pout), jnp.float32).at[:fi, :fo].set(w).astype(jnp.bfloat16)

    def pad_b(b, pout):
        return jnp.zeros((1, pout), jnp.float32).at[:, :b.shape[1]].set(b)

    return [
        (pad_w(w1, PAD_IN, H1), pad_b(b1, H1)),
        (pad_w(w2, H1, H2), pad_b(b2, H2)),
        (pad_w(w3, H2, H3), pad_b(b3, H3)),
        (pad_w(w4, H3, H4), pad_b(b4, H4)),
        # fc5 stored as a (1, 128) bf16 row vector (w5^T, zero-padded) + (1, 1) f32 bias.
        (jnp.zeros((1, H4), jnp.float32).at[0, :w5.shape[0]].set(w5[:, 0]).astype(jnp.bfloat16),
         b5.reshape(1, 1).astype(jnp.float32)),
    ]


@jax.jit
def net_forward(x, prepped):
    """x: [B, 77] f32; prepped: output of prepare_params(). Returns [B, 1] f32 sigmoid."""
    B, F = x.shape
    assert F == IN_DIM
    tile_b = _pick_tile_b(B)
    num_tiles = pl.cdiv(B, tile_b)
    b_pad = num_tiles * tile_b
    if b_pad != B:   # only batch rows, and only when B is not already a tile multiple
        x = jnp.pad(x, ((0, b_pad - B), (0, 0)))

    flat_params = []
    in_specs = [pl.BlockSpec((tile_b, IN_DIM), lambda i: (i, 0))]
    for (w, b) in prepped:
        flat_params.extend([w, b])
        # Whole-array blocks with constant index_maps: fetched once, VMEM-resident all steps.
        in_specs.append(pl.BlockSpec(w.shape, lambda i: (0, 0)))
        in_specs.append(pl.BlockSpec(b.shape, lambda i: (0, 0)))

    # Packed logits: one lane-dense (1, tile_b) row per grid step, 4 B per batch element.
    out_spec = pl.BlockSpec((1, 1, tile_b), lambda i: (i, 0, 0))

    out = pl.pallas_call(
        mlp_kernel,
        out_shape=jax.ShapeDtypeStruct((num_tiles, 1, tile_b), jnp.float32),
        grid_spec=pltpu.PrefetchScalarGridSpec(
            num_scalar_prefetch=0,
            grid=(num_tiles,),
            in_specs=in_specs,
            out_specs=out_spec,
            scratch_shapes=[pltpu.VMEM((tile_b, PAD_IN), jnp.float32)],
        ),
        compiler_params=pltpu.CompilerParams(
            dimension_semantics=("parallel",)),   # batch tiles shard across TCs (v7x megacore)
    )(x, *flat_params)

    # Packed logits -> (B, 1); only b_pad f32 values, negligible wrapper work.
    return out.reshape(b_pad, 1)[:B]


def init_params(key):
    """Deterministic init mimicking PyTorch's default Linear init (uniform +-1/sqrt(fan_in))."""
    params = []
    for fan_in, fan_out in zip(DIMS[:-1], DIMS[1:]):
        key, kw, kb = jax.random.split(key, 3)
        bound = 1.0 / jnp.sqrt(float(fan_in))
        w = jax.random.uniform(kw, (fan_in, fan_out), jnp.float32, -bound, bound)
        b = jax.random.uniform(kb, (1, fan_out), jnp.float32, -bound, bound)
        params.append((w, b))
    return params


def reference_forward(x, params):
    """Pure-JAX reference using the same bf16-weights / f32-accumulate recipe as the kernel."""
    h = x.astype(jnp.bfloat16)
    for i, (w, b) in enumerate(params):
        z = jnp.dot(h, w.astype(jnp.bfloat16), preferred_element_type=jnp.float32) + b
        h = jnp.maximum(z, 0.0).astype(jnp.bfloat16) if i < len(params) - 1 else z
    return jax.nn.sigmoid(h)


if __name__ == "__main__":
    key = jax.random.PRNGKey(0)
    kx, kp = jax.random.split(key)

    B = 1000  # tile_b=256 -> 4 grid steps (2 per TensorCore on v7x); exercises batch padding
    x = jax.random.normal(kx, (B, IN_DIM), jnp.float32)
    params = init_params(kp)
    prepped = prepare_params(params)   # one-time weight pad/cast, outside the forward path

    out = jax.block_until_ready(net_forward(x, prepped))
    ref = reference_forward(x, params)

    assert out.shape == (B, 1), out.shape
    # bf16 matmuls vs matched-precision reference: loose-ish tolerance.
    assert jnp.allclose(out, ref, atol=2e-2, rtol=2e-2), "mismatch vs reference"

    print("KERNEL_OK")
</pallas_src>

<mosaic_0001>
module attributes {stable_mosaic.version = 11 : i64} {
  func.func @mlp_kernel(%arg0: i32, %arg1: memref<256x77xf32, #tpu.memory_space<vmem>>, %arg2: memref<128x256xbf16, #tpu.memory_space<vmem>>, %arg3: memref<1x256xf32, #tpu.memory_space<vmem>>, %arg4: memref<256x256xbf16, #tpu.memory_space<vmem>>, %arg5: memref<1x256xf32, #tpu.memory_space<vmem>>, %arg6: memref<256x128xbf16, #tpu.memory_space<vmem>>, %arg7: memref<1x128xf32, #tpu.memory_space<vmem>>, %arg8: memref<128x128xbf16, #tpu.memory_space<vmem>>, %arg9: memref<1x128xf32, #tpu.memory_space<vmem>>, %arg10: memref<1x128xbf16, #tpu.memory_space<vmem>>, %arg11: memref<1x1xf32, #tpu.memory_space<vmem>>, %arg12: memref<1x1x256xf32, #tpu.memory_space<vmem>>, %arg13: memref<256x128xf32, #tpu.memory_space<vmem>>) attributes {dimension_semantics = [#tpu.dimension_semantics<parallel>], iteration_bounds = array<i64: 4>, scalar_prefetch = 0 : i64, scratch_operands = 1 : i64, tpu.core_type = #tpu.core_type<tc>, window_params = [{transform_indices = @transform_0, window_bounds = array<i64: 256, 77>}, {pipeline_mode = #tpu.pipeline_mode<synchronous>, transform_indices = @transform_1, window_bounds = array<i64: 128, 256>}, {pipeline_mode = #tpu.pipeline_mode<synchronous>, transform_indices = @transform_2, window_bounds = array<i64: 1, 256>}, {pipeline_mode = #tpu.pipeline_mode<synchronous>, transform_indices = @transform_3, window_bounds = array<i64: 256, 256>}, {pipeline_mode = #tpu.pipeline_mode<synchronous>, transform_indices = @transform_4, window_bounds = array<i64: 1, 256>}, {pipeline_mode = #tpu.pipeline_mode<synchronous>, transform_indices = @transform_5, window_bounds = array<i64: 256, 128>}, {pipeline_mode = #tpu.pipeline_mode<synchronous>, transform_indices = @transform_6, window_bounds = array<i64: 1, 128>}, {pipeline_mode = #tpu.pipeline_mode<synchronous>, transform_indices = @transform_7, window_bounds = array<i64: 128, 128>}, {pipeline_mode = #tpu.pipeline_mode<synchronous>, transform_indices = @transform_8, window_bounds = array<i64: 1, 128>}, {pipeline_mode = #tpu.pipeline_mode<synchronous>, transform_indices = @transform_9, window_bounds = array<i64: 1, 128>}, {pipeline_mode = #tpu.pipeline_mode<synchronous>, transform_indices = @transform_10, window_bounds = array<i64: 1, 1>}, {transform_indices = @transform_11, window_bounds = array<i64: 1, 1, 256>}]} {
    %c0 = arith.constant 0 : index
    %c0_0 = arith.constant 0 : index
    %0 = vector.load %arg1[%c0, %c0_0] : memref<256x77xf32, #tpu.memory_space<vmem>>, vector<256x77xf32>
    %c0_1 = arith.constant 0 : index
    %c0_2 = arith.constant 0 : index
    %1 = vector.load %arg13[%c0_1, %c0_2] : memref<256x128xf32, #tpu.memory_space<vmem>>, vector<256x77xf32>
    tpu.vector_store %arg13[%c0_1, %c0_2], %0 {strides = array<i32>} : memref<256x128xf32, #tpu.memory_space<vmem>>, vector<256x77xf32>,
    %cst = arith.constant 0.000000e+00 : f32
    %2 = vector.broadcast %cst : f32 to vector<256x51xf32>
    %c0_3 = arith.constant 0 : index
    %c77 = arith.constant 77 : index
    %3 = vector.load %arg13[%c0_3, %c77] : memref<256x128xf32, #tpu.memory_space<vmem>>, vector<256x51xf32>
    tpu.vector_store %arg13[%c0_3, %c77], %2 {strides = array<i32>} : memref<256x128xf32, #tpu.memory_space<vmem>>, vector<256x51xf32>,
    %c0_4 = arith.constant 0 : index
    %c0_5 = arith.constant 0 : index
    %4 = vector.load %arg13[%c0_4, %c0_5] : memref<256x128xf32, #tpu.memory_space<vmem>>, vector<256x128xf32>
    %5 = arith.truncf %4 : vector<256x128xf32> to vector<256x128xbf16>
    %c0_6 = arith.constant 0 : index
    %c0_7 = arith.constant 0 : index
    %6 = vector.load %arg2[%c0_6, %c0_7] : memref<128x256xbf16, #tpu.memory_space<vmem>>, vector<128x256xbf16>
    %cst_8 = arith.constant dense<0.000000e+00> : vector<256x256xf32>
    %7 = tpu.matmul %5, %6, %cst_8 {dimension_numbers = #tpu.dot_dimension_numbers<[1], [0], [0], [1], [0, 0, 1, 1], [], []>} : vector<256x128xbf16>, vector<128x256xbf16>, vector<256x256xf32> -> vector<256x256xf32>
    %c0_9 = arith.constant 0 : index
    %c0_10 = arith.constant 0 : index
    %8 = vector.load %arg3[%c0_9, %c0_10] : memref<1x256xf32, #tpu.memory_space<vmem>>, vector<1x256xf32>
    %9 = vector.broadcast %8 : vector<1x256xf32> to vector<256x256xf32>
    %10 = arith.addf %7, %9 : vector<256x256xf32>
    %cst_11 = arith.constant 0.000000e+00 : f32
    %11 = vector.broadcast %cst_11 : f32 to vector<256x256xf32>
    %12 = arith.maximumf %10, %11 : vector<256x256xf32>
    %13 = arith.truncf %12 : vector<256x256xf32> to vector<256x256xbf16>
    %c0_12 = arith.constant 0 : index
    %c0_13 = arith.constant 0 : index
    %14 = vector.load %arg4[%c0_12, %c0_13] : memref<256x256xbf16, #tpu.memory_space<vmem>>, vector<256x256xbf16>
    %cst_14 = arith.constant dense<0.000000e+00> : vector<256x256xf32>
    %15 = tpu.matmul %13, %14, %cst_14 {dimension_numbers = #tpu.dot_dimension_numbers<[1], [0], [0], [1], [0, 0, 1, 1], [], []>} : vector<256x256xbf16>, vector<256x256xbf16>, vector<256x256xf32> -> vector<256x256xf32>
    %c0_15 = arith.constant 0 : index
    %c0_16 = arith.constant 0 : index
    %16 = vector.load %arg5[%c0_15, %c0_16] : memref<1x256xf32, #tpu.memory_space<vmem>>, vector<1x256xf32>
    %17 = vector.broadcast %16 : vector<1x256xf32> to vector<256x256xf32>
    %18 = arith.addf %15, %17 : vector<256x256xf32>
    %cst_17 = arith.constant 0.000000e+00 : f32
    %19 = vector.broadcast %cst_17 : f32 to vector<256x256xf32>
    %20 = arith.maximumf %18, %19 : vector<256x256xf32>
    %21 = arith.truncf %20 : vector<256x256xf32> to vector<256x256xbf16>
    %c0_18 = arith.constant 0 : index
    %c0_19 = arith.constant 0 : index
    %22 = vector.load %arg6[%c0_18, %c0_19] : memref<256x128xbf16, #tpu.memory_space<vmem>>, vector<256x128xbf16>
    %cst_20 = arith.constant dense<0.000000e+00> : vector<256x128xf32>
    %23 = tpu.matmul %21, %22, %cst_20 {dimension_numbers = #tpu.dot_dimension_numbers<[1], [0], [0], [1], [0, 0, 1, 1], [], []>} : vector<256x256xbf16>, vector<256x128xbf16>, vector<256x128xf32> -> vector<256x128xf32>
    %c0_21 = arith.constant 0 : index
    %c0_22 = arith.constant 0 : index
    %24 = vector.load %arg7[%c0_21, %c0_22] : memref<1x128xf32, #tpu.memory_space<vmem>>, vector<1x128xf32>
    %25 = vector.broadcast %24 : vector<1x128xf32> to vector<256x128xf32>
    %26 = arith.addf %23, %25 : vector<256x128xf32>
    %cst_23 = arith.constant 0.000000e+00 : f32
    %27 = vector.broadcast %cst_23 : f32 to vector<256x128xf32>
    %28 = arith.maximumf %26, %27 : vector<256x128xf32>
    %29 = arith.truncf %28 : vector<256x128xf32> to vector<256x128xbf16>
    %c0_24 = arith.constant 0 : index
    %c0_25 = arith.constant 0 : index
    %30 = vector.load %arg8[%c0_24, %c0_25] : memref<128x128xbf16, #tpu.memory_space<vmem>>, vector<128x128xbf16>
    %cst_26 = arith.constant dense<0.000000e+00> : vector<256x128xf32>
    %31 = tpu.matmul %29, %30, %cst_26 {dimension_numbers = #tpu.dot_dimension_numbers<[1], [0], [0], [1], [0, 0, 1, 1], [], []>} : vector<256x128xbf16>, vector<128x128xbf16>, vector<256x128xf32> -> vector<256x128xf32>
    %c0_27 = arith.constant 0 : index
    %c0_28 = arith.constant 0 : index
    %32 = vector.load %arg9[%c0_27, %c0_28] : memref<1x128xf32, #tpu.memory_space<vmem>>, vector<1x128xf32>
    %33 = vector.broadcast %32 : vector<1x128xf32> to vector<256x128xf32>
    %34 = arith.addf %31, %33 : vector<256x128xf32>
    %cst_29 = arith.constant 0.000000e+00 : f32
    %35 = vector.broadcast %cst_29 : f32 to vector<256x128xf32>
    %36 = arith.maximumf %34, %35 : vector<256x128xf32>
    %37 = arith.truncf %36 : vector<256x128xf32> to vector<256x128xbf16>
    %c0_30 = arith.constant 0 : index
    %c0_31 = arith.constant 0 : index
    %38 = vector.load %arg10[%c0_30, %c0_31] : memref<1x128xbf16, #tpu.memory_space<vmem>>, vector<1x128xbf16>
    %cst_32 = arith.constant dense<0.000000e+00> : vector<1x256xf32>
    %39 = tpu.matmul %38, %37, %cst_32 {dimension_numbers = #tpu.dot_dimension_numbers<[1], [1], [0], [0], [0, 0, 1, 0], [], []>} : vector<1x128xbf16>, vector<256x128xbf16>, vector<1x256xf32> -> vector<1x256xf32>
    %c0_33 = arith.constant 0 : index
    %c0_34 = arith.constant 0 : index
    %40 = vector.load %arg11[%c0_33, %c0_34] : memref<1x1xf32, #tpu.memory_space<vmem>>, vector<1x1xf32>
    %41 = vector.broadcast %40 : vector<1x1xf32> to vector<1x256xf32>
    %42 = arith.addf %39, %41 : vector<1x256xf32>
    %cst_35 = arith.constant 0.000000e+00 : f32
    %43 = vector.broadcast %cst_35 : f32 to vector<1x256xf32>
    %44 = arith.subf %43, %42 : vector<1x256xf32>
    %45 = math.exp %44 : vector<1x256xf32>
    %cst_36 = arith.constant 1.000000e+00 : f32
    %46 = vector.broadcast %cst_36 : f32 to vector<1x256xf32>
    %47 = arith.addf %46, %45 : vector<1x256xf32>
    %cst_37 = arith.constant 1.000000e+00 : f32
    %48 = vector.broadcast %cst_37 : f32 to vector<1x256xf32>
    %49 = arith.divf %48, %47 : vector<1x256xf32>
    %c0_38 = arith.constant 0 : index
    %c0_39 = arith.constant 0 : index
    %c0_40 = arith.constant 0 : index
    %50 = vector.load %arg12[%c0_38, %c0_39, %c0_40] : memref<1x1x256xf32, #tpu.memory_space<vmem>>, vector<1x1x256xf32>
    %51 = vector.shape_cast %50 : vector<1x1x256xf32> to vector<1x256xf32>
    %52 = vector.shape_cast %49 : vector<1x256xf32> to vector<1x1x256xf32>
    tpu.vector_store %arg12[%c0_38, %c0_39, %c0_40], %52 {strides = array<i32>} : memref<1x1x256xf32, #tpu.memory_space<vmem>>, vector<1x1x256xf32>,
    return
  }
  func.func @transform_0(%arg0: i32) -> (i32, i32) {
    %c0_i32 = arith.constant 0 : i32
    %c0_i32_0 = arith.constant 0 : i32
    return %arg0, %c0_i32 : i32, i32
  }
  func.func @transform_1(%arg0: i32) -> (i32, i32) {
    %c0_i32 = arith.constant 0 : i32
    %c0_i32_0 = arith.constant 0 : i32
    %c0_i32_1 = arith.constant 0 : i32
    return %c0_i32, %c0_i32_0 : i32, i32
  }
  func.func @transform_2(%arg0: i32) -> (i32, i32) {
    %c0_i32 = arith.constant 0 : i32
    %c0_i32_0 = arith.constant 0 : i32
    %c0_i32_1 = arith.constant 0 : i32
    return %c0_i32, %c0_i32_0 : i32, i32
  }
  func.func @transform_3(%arg0: i32) -> (i32, i32) {
    %c0_i32 = arith.constant 0 : i32
    %c0_i32_0 = arith.constant 0 : i32
    %c0_i32_1 = arith.constant 0 : i32
    return %c0_i32, %c0_i32_0 : i32, i32
  }
  func.func @transform_4(%arg0: i32) -> (i32, i32) {
    %c0_i32 = arith.constant 0 : i32
    %c0_i32_0 = arith.constant 0 : i32
    %c0_i32_1 = arith.constant 0 : i32
    return %c0_i32, %c0_i32_0 : i32, i32
  }
  func.func @transform_5(%arg0: i32) -> (i32, i32) {
    %c0_i32 = arith.constant 0 : i32
    %c0_i32_0 = arith.constant 0 : i32
    %c0_i32_1 = arith.constant 0 : i32
    return %c0_i32, %c0_i32_0 : i32, i32
  }
  func.func @transform_6(%arg0: i32) -> (i32, i32) {
    %c0_i32 = arith.constant 0 : i32
    %c0_i32_0 = arith.constant 0 : i32
    %c0_i32_1 = arith.constant 0 : i32
    return %c0_i32, %c0_i32_0 : i32, i32
  }
  func.func @transform_7(%arg0: i32) -> (i32, i32) {
    %c0_i32 = arith.constant 0 : i32
    %c0_i32_0 = arith.constant 0 : i32
    %c0_i32_1 = arith.constant 0 : i32
    return %c0_i32, %c0_i32_0 : i32, i32
  }
  func.func @transform_8(%arg0: i32) -> (i32, i32) {
    %c0_i32 = arith.constant 0 : i32
    %c0_i32_0 = arith.constant 0 : i32
    %c0_i32_1 = arith.constant 0 : i32
    return %c0_i32, %c0_i32_0 : i32, i32
  }
  func.func @transform_9(%arg0: i32) -> (i32, i32) {
    %c0_i32 = arith.constant 0 : i32
    %c0_i32_0 = arith.constant 0 : i32
    %c0_i32_1 = arith.constant 0 : i32
    return %c0_i32, %c0_i32_0 : i32, i32
  }
  func.func @transform_10(%arg0: i32) -> (i32, i32) {
    %c0_i32 = arith.constant 0 : i32
    %c0_i32_0 = arith.constant 0 : i32
    %c0_i32_1 = arith.constant 0 : i32
    return %c0_i32, %c0_i32_0 : i32, i32
  }
  func.func @transform_11(%arg0: i32) -> (i32, i32, i32) {
    %c0_i32 = arith.constant 0 : i32
    %c0_i32_0 = arith.constant 0 : i32
    %c0_i32_1 = arith.constant 0 : i32
    return %arg0, %c0_i32, %c0_i32_0 : i32, i32, i32
  }
}

</mosaic_0001>

<llo_original>
// kernel: net_forward.1
$region0: #{net_forward.1}
  #allocation0 [shape = 'u32[]', space=smem, size = 0x4, offset = 0x4, fixed_abs, tag = 'smem constant byte address 0x4 - core index']
  #allocation1 [shape = 'u32[72,128]{1,0:T(1,128)}', space=vmem, size = 0x9000, scoped, tag = 'internal scratch']
  #allocation2 [shape = 'f32[256,128]{1,0:T(8,128)}', space=vmem, size = 0x20000, scoped, tag = 'scratch operand']
  #allocation3 [shape = 'f32[1,1]{1,0:T(1,128)S(1)}', space=vmem, size = 0x200, scoped, tag = 'scoped memory for net_forward.1']
  %s0 = inlined_call_operand.vmem [shape: f32[1024,77], index: 0, kind: input, shape index: {}]
  %s1 = inlined_call_operand.vmem [shape: bf16[128,256], index: 1, kind: input, shape index: {}]
  %s2 = inlined_call_operand.vmem [shape: f32[1,256], index: 2, kind: input, shape index: {}]
  %s3 = inlined_call_operand.vmem [shape: bf16[256,256], index: 3, kind: input, shape index: {}]
  %s4 = inlined_call_operand.vmem [shape: f32[1,256], index: 4, kind: input, shape index: {}]
  %s5 = inlined_call_operand.vmem [shape: bf16[256,128], index: 5, kind: input, shape index: {}]
  %s6 = inlined_call_operand.vmem [shape: f32[1,128], index: 6, kind: input, shape index: {}]
  %s7 = inlined_call_operand.vmem [shape: bf16[128,128], index: 7, kind: input, shape index: {}]
  %s8 = inlined_call_operand.vmem [shape: f32[1,128], index: 8, kind: input, shape index: {}]
  %s9 = inlined_call_operand.vmem [shape: bf16[1,128], index: 9, kind: input, shape index: {}]
  %s10 = inlined_call_operand.<no memory space> [shape: f32[1,1], index: 10, kind: input, shape index: {}]
  %s11 = inlined_call_operand.hbm [shape: f32[4,1,256], index: 11, kind: output, shape index: {}]
  %s12 = sld [smem:[#allocation0]]
  $region77: #{net_forward.1} parent=0
    _
  %s14 = ssub.s32 1, %s12
  %s15 = scalar_select 0, %s14, %s12
  %v16 = vstv %s10
  %17 = vst [vmem:[#allocation3] sm:$0x1] %v16
  $region1: #{net_forward.1} parent=0
    #allocation4 [shape = 'u8[2048]{0}', space=vmem, size = 0x800, scoped, tag = 'output window, operand 0']
    #allocation5 [shape = 's32[2]{0}', space=sflag, size = 0x8, scoped, tag = 'scoped memory for net_forward.1']
    %18 = vsyncpa [#allocation5], 0
    %s19 = scalar_lea.sflag [#allocation5], 1
    %20 = vsyncpa %s19, 0
    loop: start=0, step=1, limit=6
    $region2: #{net_forward.1} parent=1 // loop_pre_header
      _
    $region3: #{net_forward.1} parent=1 // loop_header
      %s22 = sphi 0, %s26
      %p23 = scmp.ge.s32.totalorder %s22, 6
      %s32 = sphi 0, %s34
      %s35 = sphi 0, %s32
      %s36 = sphi 0, %s35
      %s52 = sphi 0, %s36
      %s56 = sphi 0, %s56
      %s58 = sphi 0, %s56
      %s59 = sphi 0, %s58
      %s73 = sphi 0, %s59
      %s77 = sphi 0, %s77
      %s79 = sphi 0, %s77
      %s80 = sphi 0, %s79
      %s94 = sphi 0, %s80
      %s98 = sphi 0, %s98
      %s100 = sphi 0, %s98
      %s101 = sphi 0, %s100
      %s115 = sphi 0, %s101
      %s119 = sphi 0, %s119
      %s121 = sphi 0, %s119
      %s122 = sphi 0, %s121
      %s136 = sphi 0, %s122
      %s140 = sphi 0, %s140
      %s142 = sphi 0, %s140
      %s143 = sphi 0, %s142
      %s157 = sphi 0, %s143
      %s161 = sphi 0, %s161
      %s163 = sphi 0, %s161
      %s164 = sphi 0, %s163
      %s178 = sphi 0, %s164
      %s182 = sphi 0, %s182
      %s184 = sphi 0, %s182
      %s185 = sphi 0, %s184
      %s199 = sphi 0, %s185
      %s203 = sphi 0, %s203
      %s205 = sphi 0, %s203
      %s206 = sphi 0, %s205
      %s220 = sphi 0, %s206
      %s224 = sphi 0, %s224
      %s226 = sphi 0, %s224
      %s227 = sphi 0, %s226
      %s241 = sphi 0, %s227
      %s245 = sphi 0, %s245
      %s247 = sphi 0, %s245
      %s248 = sphi 0, %s247
      %s262 = sphi 0, %s248
      %s268 = sphi 0, %s270
      %s271 = sphi 0, %s268
      %s272 = sphi 0, %s271
      %s288 = sphi 0, %s272
    $region4: #{net_forward.1} parent=1 // loop_header_branch
      %25 = sbr.rel (%p23) target = $region8
    $region5: #{net_forward.1} parent=1 // loop_body
      %s27 = ssub.s32 %s22, 1
      %s28 = ssub.s32 %s22, 2
      %s29 = sadd.s32 %s22, 1
      %s30 = ssub.s32 %s22, %s29
      %p31 = scmp.eq.s32.totalorder %s30, 0
      %s33 = sadd.s32 %s32, 1
      %s34 = scalar_select %p31, %s32, %s33
      %p37 = pneg %p31
      %p38 = scmp.eq.s32.totalorder %s22, 3
      %p39 = por %p37, %p38
      %p40 = scmp.ne.s32.totalorder %s32, %s35
      %p41 = scmp.eq.s32.totalorder %s22, 0
      %p42 = por %p40, %p41
      %p43 = scmp.ne.s32.totalorder %s32, %s35
      %p44 = scmp.eq.s32.totalorder %s27, 3
      %p45 = por %p43, %p44
      %p46 = scmp.ne.s32.totalorder %s35, %s36
      %p47 = scmp.eq.s32.totalorder %s27, 0
      %p48 = por %p46, %p47
      %p49 = scmp.ne.s32.totalorder %s35, %s36
      %p50 = scmp.eq.s32.totalorder %s28, 3
      %p51 = por %p49, %p50
      %p53 = scmp.ne.s32.totalorder %s36, %s52
      %p54 = scmp.eq.s32.totalorder %s28, 0
      %p55 = por %p53, %p54
      %s57 = sadd.s32 %s56, 1
      %p60 = scmp.eq.s32.totalorder %s22, 3
      %p61 = scmp.ne.s32.totalorder %s56, %s58
      %p62 = scmp.eq.s32.totalorder %s22, 0
      %p63 = por %p61, %p62
      %p64 = scmp.ne.s32.totalorder %s56, %s58
      %p65 = scmp.eq.s32.totalorder %s27, 3
      %p66 = por %p64, %p65
      %p67 = scmp.ne.s32.totalorder %s58, %s59
      %p68 = scmp.eq.s32.totalorder %s27, 0
      %p69 = por %p67, %p68
      %p70 = scmp.ne.s32.totalorder %s58, %s59
      %p71 = scmp.eq.s32.totalorder %s28, 3
      %p72 = por %p70, %p71
      %p74 = scmp.ne.s32.totalorder %s59, %s73
      %p75 = scmp.eq.s32.totalorder %s28, 0
      %p76 = por %p74, %p75
      %s78 = sadd.s32 %s77, 1
      %p81 = scmp.eq.s32.totalorder %s22, 3
      %p82 = scmp.ne.s32.totalorder %s77, %s79
      %p83 = scmp.eq.s32.totalorder %s22, 0
      %p84 = por %p82, %p83
      %p85 = scmp.ne.s32.totalorder %s77, %s79
      %p86 = scmp.eq.s32.totalorder %s27, 3
      %p87 = por %p85, %p86
      %p88 = scmp.ne.s32.totalorder %s79, %s80
      %p89 = scmp.eq.s32.totalorder %s27, 0
      %p90 = por %p88, %p89
      %p91 = scmp.ne.s32.totalorder %s79, %s80
      %p92 = scmp.eq.s32.totalorder %s28, 3
      %p93 = por %p91, %p92
      %p95 = scmp.ne.s32.totalorder %s80, %s94
      %p96 = scmp.eq.s32.totalorder %s28, 0
      %p97 = por %p95, %p96
      %s99 = sadd.s32 %s98, 1
      %p102 = scmp.eq.s32.totalorder %s22, 3
      %p103 = scmp.ne.s32.totalorder %s98, %s100
      %p104 = scmp.eq.s32.totalorder %s22, 0
      %p105 = por %p103, %p104
      %p106 = scmp.ne.s32.totalorder %s98, %s100
      %p107 = scmp.eq.s32.totalorder %s27, 3
      %p108 = por %p106, %p107
      %p109 = scmp.ne.s32.totalorder %s100, %s101
      %p110 = scmp.eq.s32.totalorder %s27, 0
      %p111 = por %p109, %p110
      %p112 = scmp.ne.s32.totalorder %s100, %s101
      %p113 = scmp.eq.s32.totalorder %s28, 3
      %p114 = por %p112, %p113
      %p116 = scmp.ne.s32.totalorder %s101, %s115
      %p117 = scmp.eq.s32.totalorder %s28, 0
      %p118 = por %p116, %p117
      %s120 = sadd.s32 %s119, 1
      %p123 = scmp.eq.s32.totalorder %s22, 3
      %p124 = scmp.ne.s32.totalorder %s119, %s121
      %p125 = scmp.eq.s32.totalorder %s22, 0
      %p126 = por %p124, %p125
      %p127 = scmp.ne.s32.totalorder %s119, %s121
      %p128 = scmp.eq.s32.totalorder %s27, 3
      %p129 = por %p127, %p128
      %p130 = scmp.ne.s32.totalorder %s121, %s122
      %p131 = scmp.eq.s32.totalorder %s27, 0
      %p132 = por %p130, %p131
      %p133 = scmp.ne.s32.totalorder %s121, %s122
      %p134 = scmp.eq.s32.totalorder %s28, 3
      %p135 = por %p133, %p134
      %p137 = scmp.ne.s32.totalorder %s122, %s136
      %p138 = scmp.eq.s32.totalorder %s28, 0
      %p139 = por %p137, %p138
      %s141 = sadd.s32 %s140, 1
      %p144 = scmp.eq.s32.totalorder %s22, 3
      %p145 = scmp.ne.s32.totalorder %s140, %s142
      %p146 = scmp.eq.s32.totalorder %s22, 0
      %p147 = por %p145, %p146
      %p148 = scmp.ne.s32.totalorder %s140, %s142
      %p149 = scmp.eq.s32.totalorder %s27, 3
      %p150 = por %p148, %p149
      %p151 = scmp.ne.s32.totalorder %s142, %s143
      %p152 = scmp.eq.s32.totalorder %s27, 0
      %p153 = por %p151, %p152
      %p154 = scmp.ne.s32.totalorder %s142, %s143
      %p155 = scmp.eq.s32.totalorder %s28, 3
      %p156 = por %p154, %p155
      %p158 = scmp.ne.s32.totalorder %s143, %s157
      %p159 = scmp.eq.s32.totalorder %s28, 0
      %p160 = por %p158, %p159
      %s162 = sadd.s32 %s161, 1
      %p165 = scmp.eq.s32.totalorder %s22, 3
      %p166 = scmp.ne.s32.totalorder %s161, %s163
      %p167 = scmp.eq.s32.totalorder %s22, 0
      %p168 = por %p166, %p167
      %p169 = scmp.ne.s32.totalorder %s161, %s163
      %p170 = scmp.eq.s32.totalorder %s27, 3
      %p171 = por %p169, %p170
      %p172 = scmp.ne.s32.totalorder %s163, %s164
      %p173 = scmp.eq.s32.totalorder %s27, 0
      %p174 = por %p172, %p173
      %p175 = scmp.ne.s32.totalorder %s163, %s164
      %p176 = scmp.eq.s32.totalorder %s28, 3
      %p177 = por %p175, %p176
      %p179 = scmp.ne.s32.totalorder %s164, %s178
      %p180 = scmp.eq.s32.totalorder %s28, 0
      %p181 = por %p179, %p180
      %s183 = sadd.s32 %s182, 1
      %p186 = scmp.eq.s32.totalorder %s22, 3
      %p187 = scmp.ne.s32.totalorder %s182, %s184
      %p188 = scmp.eq.s32.totalorder %s22, 0
      %p189 = por %p187, %p188
      %p190 = scmp.ne.s32.totalorder %s182, %s184
      %p191 = scmp.eq.s32.totalorder %s27, 3
      %p192 = por %p190, %p191
      %p193 = scmp.ne.s32.totalorder %s184, %s185
      %p194 = scmp.eq.s32.totalorder %s27, 0
      %p195 = por %p193, %p194
      %p196 = scmp.ne.s32.totalorder %s184, %s185
      %p197 = scmp.eq.s32.totalorder %s28, 3
      %p198 = por %p196, %p197
      %p200 = scmp.ne.s32.totalorder %s185, %s199
      %p201 = scmp.eq.s32.totalorder %s28, 0
      %p202 = por %p200, %p201
      %s204 = sadd.s32 %s203, 1
      %p207 = scmp.eq.s32.totalorder %s22, 3
      %p208 = scmp.ne.s32.totalorder %s203, %s205
      %p209 = scmp.eq.s32.totalorder %s22, 0
      %p210 = por %p208, %p209
      %p211 = scmp.ne.s32.totalorder %s203, %s205
      %p212 = scmp.eq.s32.totalorder %s27, 3
      %p213 = por %p211, %p212
      %p214 = scmp.ne.s32.totalorder %s205, %s206
      %p215 = scmp.eq.s32.totalorder %s27, 0
      %p216 = por %p214, %p215
      %p217 = scmp.ne.s32.totalorder %s205, %s206
      %p218 = scmp.eq.s32.totalorder %s28, 3
      %p219 = por %p217, %p218
      %p221 = scmp.ne.s32.totalorder %s206, %s220
      %p222 = scmp.eq.s32.totalorder %s28, 0
      %p223 = por %p221, %p222
      %s225 = sadd.s32 %s224, 1
      %p228 = scmp.eq.s32.totalorder %s22, 3
      %p229 = scmp.ne.s32.totalorder %s224, %s226
      %p230 = scmp.eq.s32.totalorder %s22, 0
      %p231 = por %p229, %p230
      %p232 = scmp.ne.s32.totalorder %s224, %s226
      %p233 = scmp.eq.s32.totalorder %s27, 3
      %p234 = por %p232, %p233
      %p235 = scmp.ne.s32.totalorder %s226, %s227
      %p236 = scmp.eq.s32.totalorder %s27, 0
      %p237 = por %p235, %p236
      %p238 = scmp.ne.s32.totalorder %s226, %s227
      %p239 = scmp.eq.s32.totalorder %s28, 3
      %p240 = por %p238, %p239
      %p242 = scmp.ne.s32.totalorder %s227, %s241
      %p243 = scmp.eq.s32.totalorder %s28, 0
      %p244 = por %p242, %p243
      %s246 = sadd.s32 %s245, 1
      %p249 = scmp.eq.s32.totalorder %s22, 3
      %p250 = scmp.ne.s32.totalorder %s245, %s247
      %p251 = scmp.eq.s32.totalorder %s22, 0
      %p252 = por %p250, %p251
      %p253 = scmp.ne.s32.totalorder %s245, %s247
      %p254 = scmp.eq.s32.totalorder %s27, 3
      %p255 = por %p253, %p254
      %p256 = scmp.ne.s32.totalorder %s247, %s248
      %p257 = scmp.eq.s32.totalorder %s27, 0
      %p258 = por %p256, %p257
      %p259 = scmp.ne.s32.totalorder %s247, %s248
      %p260 = scmp.eq.s32.totalorder %s28, 3
      %p261 = por %p259, %p260
      %p263 = scmp.ne.s32.totalorder %s248, %s262
      %p264 = scmp.eq.s32.totalorder %s28, 0
      %p265 = por %p263, %p264
      %s266 = ssub.s32 %s22, %s29
      %p267 = scmp.eq.s32.totalorder %s266, 0
      %s269 = sadd.s32 %s268, 1
      %s270 = scalar_select %p267, %s268, %s269
      %p273 = pneg %p267
      %p274 = scmp.eq.s32.totalorder %s22, 3
      %p275 = por %p273, %p274
      %p276 = scmp.ne.s32.totalorder %s268, %s271
      %p277 = scmp.eq.s32.totalorder %s22, 0
      %p278 = por %p276, %p277
      %p279 = scmp.ne.s32.totalorder %s268, %s271
      %p280 = scmp.eq.s32.totalorder %s27, 3
      %p281 = por %p279, %p280
      %p282 = scmp.ne.s32.totalorder %s271, %s272
      %p283 = scmp.eq.s32.totalorder %s27, 0
      %p284 = por %p282, %p283
      %p285 = scmp.ne.s32.totalorder %s271, %s272
      %p286 = scmp.eq.s32.totalorder %s28, 3
      %p287 = por %p285, %p286
      %p289 = scmp.ne.s32.totalorder %s272, %s288
      %p290 = scmp.eq.s32.totalorder %s28, 0
      %p291 = por %p289, %p290
      %p292 = scmp.le.s32.totalorder 1, %s22
      %p293 = scmp.lt.s32.totalorder %s22, 5
      %p294 = pnand %p292, %p293
      %p295 = pneg %p294
      // Predicated region
      $region9: #{net_forward.1} parent=5 // pred_check
        _
      $region10: #{net_forward.1} parent=5 // pred_check_branch
        %297 = sbr.rel (%p294) target = $region12
      $region11: #{net_forward.1} parent=5 // pred_region
        %s298 = ssub.s32 %s22, 1
        // Predicated region
        $region13: #{net_forward.1} parent=11 // pred_check
          %p299 = pneg %p69
        $region14: #{net_forward.1} parent=11 // pred_check_branch
          %301 = sbr.rel (%p299) target = $region16
        $region15: #{net_forward.1} parent=11 // pred_region
          _
        $region16: #{net_forward.1} parent=11 // pred_fallthru
          _
        // Predicated region
        $region17: #{net_forward.1} parent=11 // pred_check
          %p302 = pneg %p90
        $region18: #{net_forward.1} parent=11 // pred_check_branch
          %304 = sbr.rel (%p302) target = $region20
        $region19: #{net_forward.1} parent=11 // pred_region
          _
        $region20: #{net_forward.1} parent=11 // pred_fallthru
          _
        // Predicated region
        $region21: #{net_forward.1} parent=11 // pred_check
          %p305 = pneg %p111
        $region22: #{net_forward.1} parent=11 // pred_check_branch
          %307 = sbr.rel (%p305) target = $region24
        $region23: #{net_forward.1} parent=11 // pred_region
          _
        $region24: #{net_forward.1} parent=11 // pred_fallthru
          _
        // Predicated region
        $region25: #{net_forward.1} parent=11 // pred_check
          %p308 = pneg %p132
        $region26: #{net_forward.1} parent=11 // pred_check_branch
          %310 = sbr.rel (%p308) target = $region28
        $region27: #{net_forward.1} parent=11 // pred_region
          _
        $region28: #{net_forward.1} parent=11 // pred_fallthru
          _
        // Predicated region
        $region29: #{net_forward.1} parent=11 // pred_check
          %p311 = pneg %p153
        $region30: #{net_forward.1} parent=11 // pred_check_branch
          %313 = sbr.rel (%p311) target = $region32
        $region31: #{net_forward.1} parent=11 // pred_region
          _
        $region32: #{net_forward.1} parent=11 // pred_fallthru
          _
        // Predicated region
        $region33: #{net_forward.1} parent=11 // pred_check
          %p314 = pneg %p174
        $region34: #{net_forward.1} parent=11 // pred_check_branch
          %316 = sbr.rel (%p314) target = $region36
        $region35: #{net_forward.1} parent=11 // pred_region
          _
        $region36: #{net_forward.1} parent=11 // pred_fallthru
          _
        // Predicated region
        $region37: #{net_forward.1} parent=11 // pred_check
          %p317 = pneg %p195
        $region38: #{net_forward.1} parent=11 // pred_check_branch
          %319 = sbr.rel (%p317) target = $region40
        $region39: #{net_forward.1} parent=11 // pred_region
          _
        $region40: #{net_forward.1} parent=11 // pred_fallthru
          _
        // Predicated region
        $region41: #{net_forward.1} parent=11 // pred_check
          %p320 = pneg %p216
        $region42: #{net_forward.1} parent=11 // pred_check_branch
          %322 = sbr.rel (%p320) target = $region44
        $region43: #{net_forward.1} parent=11 // pred_region
          _
        $region44: #{net_forward.1} parent=11 // pred_fallthru
          _
        // Predicated region
        $region45: #{net_forward.1} parent=11 // pred_check
          %p323 = pneg %p237
        $region46: #{net_forward.1} parent=11 // pred_check_branch
          %325 = sbr.rel (%p323) target = $region48
        $region47: #{net_forward.1} parent=11 // pred_region
          _
        $region48: #{net_forward.1} parent=11 // pred_fallthru
          _
        // Predicated region
        $region49: #{net_forward.1} parent=11 // pred_check
          %p326 = pneg %p258
        $region50: #{net_forward.1} parent=11 // pred_check_branch
          %328 = sbr.rel (%p326) target = $region52
        $region51: #{net_forward.1} parent=11 // pred_region
          _
        $region52: #{net_forward.1} parent=11 // pred_fallthru
          _
      $region12: #{net_forward.1} parent=5 // pred_fallthru
        _
      %p329 = scmp.lt.s32.totalorder %s22, 4
      // Predicated region
      $region53: #{net_forward.1} parent=5 // pred_check
        %p330 = pneg %p329
      $region54: #{net_forward.1} parent=5 // pred_check_branch
        %332 = sbr.rel (%p330) target = $region56
      $region55: #{net_forward.1} parent=5 // pred_region
        // Predicated region
        $region57: #{net_forward.1} parent=55 // pred_check
          %p333 = pneg %p42
        $region58: #{net_forward.1} parent=55 // pred_check_branch
          %335 = sbr.rel (%p333) target = $region60
        $region59: #{net_forward.1} parent=55 // pred_region
          %s336 = smul.u32 32, %s22
          %p337 = scmp.lt.s32.totalorder %s336, 127
          %s338 = scalar_select %p337, %s336, 127
          %s339 = smul.addr %s338, 8
          %s340 = scalar_lea.vmem %s0, %s339
          %s341 = smul.u32 32, %s22
        $region60: #{net_forward.1} parent=55 // pred_fallthru
          _
      $region56: #{net_forward.1} parent=5 // pred_fallthru
        _
      %p342 = scmp.le.s32.totalorder 1, %s22
      %p343 = scmp.lt.s32.totalorder %s22, 5
      %p344 = pnand %p342, %p343
      %p345 = pneg %p344
      // Predicated region
      $region61: #{net_forward.1} parent=5 // pred_check
        _
      $region62: #{net_forward.1} parent=5 // pred_check_branch
        %347 = sbr.rel (%p344) target = $region64
      $region63: #{net_forward.1} parent=5 // pred_region
        %s348 = ssub.s32 %s22, 1
        %s349 = smul.u32 32, %s27
        %p350 = scmp.lt.s32.totalorder %s349, 127
        %s351 = scalar_select %p350, %s349, 127
        %s352 = smul.addr %s351, 8
        %s353 = scalar_lea.vmem %s0, %s352
        %p354 = pneg %p48
        %p355 = pneg %p45
        %p356 = pneg %p69
        %p357 = pneg %p66
        %p358 = pneg %p90
        %p359 = pneg %p87
        %p360 = pneg %p111
        %p361 = pneg %p108
        %p362 = pneg %p132
        %p363 = pneg %p129
        %p364 = pneg %p153
        %p365 = pneg %p150
        %p366 = pneg %p174
        %p367 = pneg %p171
        %p368 = pneg %p195
        %p369 = pneg %p192
        %p370 = pneg %p216
        %p371 = pneg %p213
        %p372 = pneg %p237
        %p373 = pneg %p234
        %p374 = pneg %p258
        %p375 = pneg %p255
        %p376 = pneg %p284
        %p377 = pneg %p281
        %s378 = sand.u32 %s271, 1
        %s379 = scalar_lea.sflag [#allocation5], %s378
        %s380 = sand.u32 %s271, 1
        %s381 = smul.addr %s380, 2
        %s382 = scalar_lea.vmem [#allocation4], %s381
        %s383 = smul.u32 32, %s27
        %p384 = scmp.lt.s32.totalorder %s383, 127
        %s385 = scalar_select %p384, %s383, 127
        %s386 = smul.addr %s385, 8
        %s387 = scalar_lea.vmem %s0, %s386
        %s388 = smul.u32 32, %s27
        %v389 = vld [vmem:[%s387] sm:$0xff]
        %v390 = vld [vmem:[%s387 + $0x8] sm:$0xff]
        %v391 = vld [vmem:[%s387 + $0x10] sm:$0xff]
        %v392 = vld [vmem:[%s387 + $0x18] sm:$0xff]
        %v393 = vld [vmem:[%s387 + $0x20] sm:$0xff]
        %v394 = vld [vmem:[%s387 + $0x28] sm:$0xff]
        %v395 = vld [vmem:[%s387 + $0x30] sm:$0xff]
        %v396 = vld [vmem:[%s387 + $0x38] sm:$0xff]
        %v397 = vld [vmem:[%s387 + $0x40] sm:$0xff]
        %v398 = vld [vmem:[%s387 + $0x48] sm:$0xff]
        %v399 = vld [vmem:[%s387 + $0x50] sm:$0xff]
        %v400 = vld [vmem:[%s387 + $0x58] sm:$0xff]
        %v401 = vld [vmem:[%s387 + $0x60] sm:$0xff]
        %v402 = vld [vmem:[%s387 + $0x68] sm:$0xff]
        %v403 = vld [vmem:[%s387 + $0x70] sm:$0xff]
        %v404 = vld [vmem:[%s387 + $0x78] sm:$0xff]
        %v405 = vld [vmem:[%s387 + $0x80] sm:$0xff]
        %v406 = vld [vmem:[%s387 + $0x88] sm:$0xff]
        %v407 = vld [vmem:[%s387 + $0x90] sm:$0xff]
        %v408 = vld [vmem:[%s387 + $0x98] sm:$0xff]
        %v409 = vld [vmem:[%s387 + $0xa0] sm:$0xff]
        %v410 = vld [vmem:[%s387 + $0xa8] sm:$0xff]
        %v411 = vld [vmem:[%s387 + $0xb0] sm:$0xff]
        %v412 = vld [vmem:[%s387 + $0xb8] sm:$0xff]
        %v413 = vld [vmem:[%s387 + $0xc0] sm:$0xff]
        %v414 = vld [vmem:[%s387 + $0xc8] sm:$0xff]
        %v415 = vld [vmem:[%s387 + $0xd0] sm:$0xff]
        %v416 = vld [vmem:[%s387 + $0xd8] sm:$0xff]
        %v417 = vld [vmem:[%s387 + $0xe0] sm:$0xff]
        %v418 = vld [vmem:[%s387 + $0xe8] sm:$0xff]
        %v419 = vld [vmem:[%s387 + $0xf0] sm:$0xff]
        %v420 = vld [vmem:[%s387 + $0xf8] sm:$0xff]
        %vm421 = vcmask 629760
        %422 = vst.msk [vmem:[#allocation2] sm:$0xff] %vm421, %v389
        %423 = vst.msk [vmem:[#allocation2 + $0x8] sm:$0xff] %vm421, %v390
        %424 = vst.msk [vmem:[#allocation2 + $0x10] sm:$0xff] %vm421, %v391
        %425 = vst.msk [vmem:[#allocation2 + $0x18] sm:$0xff] %vm421, %v392
        %426 = vst.msk [vmem:[#allocation2 + $0x20] sm:$0xff] %vm421, %v393
        %427 = vst.msk [vmem:[#allocation2 + $0x28] sm:$0xff] %vm421, %v394
        %428 = vst.msk [vmem:[#allocation2 + $0x30] sm:$0xff] %vm421, %v395
        %429 = vst.msk [vmem:[#allocation2 + $0x38] sm:$0xff] %vm421, %v396
        %430 = vst.msk [vmem:[#allocation2 + $0x40] sm:$0xff] %vm421, %v397
        %431 = vst.msk [vmem:[#allocation2 + $0x48] sm:$0xff] %vm421, %v398
        %432 = vst.msk [vmem:[#allocation2 + $0x50] sm:$0xff] %vm421, %v399
        %433 = vst.msk [vmem:[#allocation2 + $0x58] sm:$0xff] %vm421, %v400
        %434 = vst.msk [vmem:[#allocation2 + $0x60] sm:$0xff] %vm421, %v401
        %435 = vst.msk [vmem:[#allocation2 + $0x68] sm:$0xff] %vm421, %v402
        %436 = vst.msk [vmem:[#allocation2 + $0x70] sm:$0xff] %vm421, %v403
        %437 = vst.msk [vmem:[#allocation2 + $0x78] sm:$0xff] %vm421, %v404
        %438 = vst.msk [vmem:[#allocation2 + $0x80] sm:$0xff] %vm421, %v405
        %439 = vst.msk [vmem:[#allocation2 + $0x88] sm:$0xff] %vm421, %v406
        %440 = vst.msk [vmem:[#allocation2 + $0x90] sm:$0xff] %vm421, %v407
        %441 = vst.msk [vmem:[#allocation2 + $0x98] sm:$0xff] %vm421, %v408
        %442 = vst.msk [vmem:[#allocation2 + $0xa0] sm:$0xff] %vm421, %v409
        %443 = vst.msk [vmem:[#allocation2 + $0xa8] sm:$0xff] %vm421, %v410
        %444 = vst.msk [vmem:[#allocation2 + $0xb0] sm:$0xff] %vm421, %v411
        %445 = vst.msk [vmem:[#allocation2 + $0xb8] sm:$0xff] %vm421, %v412
        %446 = vst.msk [vmem:[#allocation2 + $0xc0] sm:$0xff] %vm421, %v413
        %447 = vst.msk [vmem:[#allocation2 + $0xc8] sm:$0xff] %vm421, %v414
        %448 = vst.msk [vmem:[#allocation2 + $0xd0] sm:$0xff] %vm421, %v415
        %449 = vst.msk [vmem:[#allocation2 + $0xd8] sm:$0xff] %vm421, %v416
        %450 = vst.msk [vmem:[#allocation2 + $0xe0] sm:$0xff] %vm421, %v417
        %451 = vst.msk [vmem:[#allocation2 + $0xe8] sm:$0xff] %vm421, %v418
        %452 = vst.msk [vmem:[#allocation2 + $0xf0] sm:$0xff] %vm421, %v419
        %453 = vst.msk [vmem:[#allocation2 + $0xf8] sm:$0xff] %vm421, %v420
        %vm454 = vcmask 1048168
        %455 = vst.msk [vmem:[#allocation2] sm:$0xff] %vm454, 0.0
        %456 = vst.msk [vmem:[#allocation2 + $0x8] sm:$0xff] %vm454, 0.0
        %457 = vst.msk [vmem:[#allocation2 + $0x10] sm:$0xff] %vm454, 0.0
        %458 = vst.msk [vmem:[#allocation2 + $0x18] sm:$0xff] %vm454, 0.0
        %459 = vst.msk [vmem:[#allocation2 + $0x20] sm:$0xff] %vm454, 0.0
        %460 = vst.msk [vmem:[#allocation2 + $0x28] sm:$0xff] %vm454, 0.0
        %461 = vst.msk [vmem:[#allocation2 + $0x30] sm:$0xff] %vm454, 0.0
        %462 = vst.msk [vmem:[#allocation2 + $0x38] sm:$0xff] %vm454, 0.0
        %463 = vst.msk [vmem:[#allocation2 + $0x40] sm:$0xff] %vm454, 0.0
        %464 = vst.msk [vmem:[#allocation2 + $0x48] sm:$0xff] %vm454, 0.0
        %465 = vst.msk [vmem:[#allocation2 + $0x50] sm:$0xff] %vm454, 0.0
        %466 = vst.msk [vmem:[#allocation2 + $0x58] sm:$0xff] %vm454, 0.0
        %467 = vst.msk [vmem:[#allocation2 + $0x60] sm:$0xff] %vm454, 0.0
        %468 = vst.msk [vmem:[#allocation2 + $0x68] sm:$0xff] %vm454, 0.0
        %469 = vst.msk [vmem:[#allocation2 + $0x70] sm:$0xff] %vm454, 0.0
        %470 = vst.msk [vmem:[#allocation2 + $0x78] sm:$0xff] %vm454, 0.0
        %471 = vst.msk [vmem:[#allocation2 + $0x80] sm:$0xff] %vm454, 0.0
        %472 = vst.msk [vmem:[#allocation2 + $0x88] sm:$0xff] %vm454, 0.0
        %473 = vst.msk [vmem:[#allocation2 + $0x90] sm:$0xff] %vm454, 0.0
        %474 = vst.msk [vmem:[#allocation2 + $0x98] sm:$0xff] %vm454, 0.0
        %475 = vst.msk [vmem:[#allocation2 + $0xa0] sm:$0xff] %vm454, 0.0
        %476 = vst.msk [vmem:[#allocation2 + $0xa8] sm:$0xff] %vm454, 0.0
        %477 = vst.msk [vmem:[#allocation2 + $0xb0] sm:$0xff] %vm454, 0.0
        %478 = vst.msk [vmem:[#allocation2 + $0xb8] sm:$0xff] %vm454, 0.0
        %479 = vst.msk [vmem:[#allocation2 + $0xc0] sm:$0xff] %vm454, 0.0
        %480 = vst.msk [vmem:[#allocation2 + $0xc8] sm:$0xff] %vm454, 0.0
        %481 = vst.msk [vmem:[#allocation2 + $0xd0] sm:$0xff] %vm454, 0.0
        %482 = vst.msk [vmem:[#allocation2 + $0xd8] sm:$0xff] %vm454, 0.0
        %483 = vst.msk [vmem:[#allocation2 + $0xe0] sm:$0xff] %vm454, 0.0
        %484 = vst.msk [vmem:[#allocation2 + $0xe8] sm:$0xff] %vm454, 0.0
        %485 = vst.msk [vmem:[#allocation2 + $0xf0] sm:$0xff] %vm454, 0.0
        %486 = vst.msk [vmem:[#allocation2 + $0xf8] sm:$0xff] %vm454, 0.0
        %v487 = vld [vmem:[#allocation2] sm:$0xff]
        %v488 = vld [vmem:[#allocation2 + $0x8] sm:$0xff]
        %v489 = vld [vmem:[#allocation2 + $0x10] sm:$0xff]
        %v490 = vld [vmem:[#allocation2 + $0x18] sm:$0xff]
        %v491 = vld [vmem:[#allocation2 + $0x20] sm:$0xff]
        %v492 = vld [vmem:[#allocation2 + $0x28] sm:$0xff]
        %v493 = vld [vmem:[#allocation2 + $0x30] sm:$0xff]
        %v494 = vld [vmem:[#allocation2 + $0x38] sm:$0xff]
        %v495 = vld [vmem:[#allocation2 + $0x40] sm:$0xff]
        %v496 = vld [vmem:[#allocation2 + $0x48] sm:$0xff]
        %v497 = vld [vmem:[#allocation2 + $0x50] sm:$0xff]
        %v498 = vld [vmem:[#allocation2 + $0x58] sm:$0xff]
        %v499 = vld [vmem:[#allocation2 + $0x60] sm:$0xff]
        %v500 = vld [vmem:[#allocation2 + $0x68] sm:$0xff]
        %v501 = vld [vmem:[#allocation2 + $0x70] sm:$0xff]
        %v502 = vld [vmem:[#allocation2 + $0x78] sm:$0xff]
        %v503 = vld [vmem:[#allocation2 + $0x80] sm:$0xff]
        %v504 = vld [vmem:[#allocation2 + $0x88] sm:$0xff]
        %v505 = vld [vmem:[#allocation2 + $0x90] sm:$0xff]
        %v506 = vld [vmem:[#allocation2 + $0x98] sm:$0xff]
        %v507 = vld [vmem:[#allocation2 + $0xa0] sm:$0xff]
        %v508 = vld [vmem:[#allocation2 + $0xa8] sm:$0xff]
        %v509 = vld [vmem:[#allocation2 + $0xb0] sm:$0xff]
        %v510 = vld [vmem:[#allocation2 + $0xb8] sm:$0xff]
        %v511 = vld [vmem:[#allocation2 + $0xc0] sm:$0xff]
        %v512 = vld [vmem:[#allocation2 + $0xc8] sm:$0xff]
        %v513 = vld [vmem:[#allocation2 + $0xd0] sm:$0xff]
        %v514 = vld [vmem:[#allocation2 + $0xd8] sm:$0xff]
        %v515 = vld [vmem:[#allocation2 + $0xe0] sm:$0xff]
        %v516 = vld [vmem:[#allocation2 + $0xe8] sm:$0xff]
        %v517 = vld [vmem:[#allocation2 + $0xf0] sm:$0xff]
        %v518 = vld [vmem:[#allocation2 + $0xf8] sm:$0xff]
        %v519 = vpack.c.bf16 %v488, %v487
        %v520 = vpack.c.bf16 %v490, %v489
        %v521 = vpack.c.bf16 %v492, %v491
        %v522 = vpack.c.bf16 %v494, %v493
        %v523 = vpack.c.bf16 %v496, %v495
        %v524 = vpack.c.bf16 %v498, %v497
        %v525 = vpack.c.bf16 %v500, %v499
        %v526 = vpack.c.bf16 %v502, %v501
        %v527 = vpack.c.bf16 %v504, %v503
        %v528 = vpack.c.bf16 %v506, %v505
        %v529 = vpack.c.bf16 %v508, %v507
        %v530 = vpack.c.bf16 %v510, %v509
        %v531 = vpack.c.bf16 %v512, %v511
        %v532 = vpack.c.bf16 %v514, %v513
        %v533 = vpack.c.bf16 %v516, %v515
        %v534 = vpack.c.bf16 %v518, %v517
        %v535 = vld [vmem:[%s1] sm:$0xff]
        %v536 = vld [vmem:[%s1 + $0x8] sm:$0xff]
        %v537 = vld [vmem:[%s1 + $0x10] sm:$0xff]
        %v538 = vld [vmem:[%s1 + $0x18] sm:$0xff]
        %v539 = vld [vmem:[%s1 + $0x20] sm:$0xff]
        %v540 = vld [vmem:[%s1 + $0x28] sm:$0xff]
        %v541 = vld [vmem:[%s1 + $0x30] sm:$0xff]
        %v542 = vld [vmem:[%s1 + $0x38] sm:$0xff]
        %v543 = vld [vmem:[%s1 + $0x40] sm:$0xff]
        %v544 = vld [vmem:[%s1 + $0x48] sm:$0xff]
        %v545 = vld [vmem:[%s1 + $0x50] sm:$0xff]
        %v546 = vld [vmem:[%s1 + $0x58] sm:$0xff]
        %v547 = vld [vmem:[%s1 + $0x60] sm:$0xff]
        %v548 = vld [vmem:[%s1 + $0x68] sm:$0xff]
        %v549 = vld [vmem:[%s1 + $0x70] sm:$0xff]
        %v550 = vld [vmem:[%s1 + $0x78] sm:$0xff]
        %v551 = vld [vmem:[%s2] sm:$0x3]
        %v553 = vperm.slane %v551, 0
        %v554 = vperm.slane %v551, 1
        %v573 = vunpack.c.l.b16 %v535
        %v574 = vunpack.c.h.b16 %v535
        %v575 = vunpack.c.l.b16 %v536
        %v576 = vunpack.c.h.b16 %v536
        %v577 = vunpack.c.l.b16 %v537
        %v578 = vunpack.c.h.b16 %v537
        %v579 = vunpack.c.l.b16 %v538
        %v580 = vunpack.c.h.b16 %v538
        %v581 = vunpack.c.l.b16 %v539
        %v582 = vunpack.c.h.b16 %v539
        %v583 = vunpack.c.l.b16 %v540
        %v584 = vunpack.c.h.b16 %v540
        %v585 = vunpack.c.l.b16 %v541
        %v586 = vunpack.c.h.b16 %v541
        %v587 = vunpack.c.l.b16 %v542
        %v588 = vunpack.c.h.b16 %v542
        %v589 = vunpack.c.l.b16 %v543
        %v590 = vunpack.c.h.b16 %v543
        %v591 = vunpack.c.l.b16 %v544
        %v592 = vunpack.c.h.b16 %v544
        %v593 = vunpack.c.l.b16 %v545
        %v594 = vunpack.c.h.b16 %v545
        %v595 = vunpack.c.l.b16 %v546
        %v596 = vunpack.c.h.b16 %v546
        %v597 = vunpack.c.l.b16 %v547
        %v598 = vunpack.c.h.b16 %v547
        %v599 = vunpack.c.l.b16 %v548
        %v600 = vunpack.c.h.b16 %v548
        %v601 = vunpack.c.l.b16 %v549
        %v602 = vunpack.c.h.b16 %v549
        %v603 = vunpack.c.l.b16 %v550
        %v604 = vunpack.c.h.b16 %v550
        %v605 = vpack.c.b16 %v575, %v573
        %v606 = vpack.c.b16 %v576, %v574
        %v607 = vpack.c.b16 %v579, %v577
        %v608 = vpack.c.b16 %v580, %v578
        %v609 = vpack.c.b16 %v583, %v581
        %v610 = vpack.c.b16 %v584, %v582
        %v611 = vpack.c.b16 %v587, %v585
        %v612 = vpack.c.b16 %v588, %v586
        %v613 = vpack.c.b16 %v591, %v589
        %v614 = vpack.c.b16 %v592, %v590
        %v615 = vpack.c.b16 %v595, %v593
        %v616 = vpack.c.b16 %v596, %v594
        %v617 = vpack.c.b16 %v599, %v597
        %v618 = vpack.c.b16 %v600, %v598
        %v619 = vpack.c.b16 %v603, %v601
        %v620 = vpack.c.b16 %v604, %v602
        %637 = vmatpush.bf16.msra.mxu0 %v619
        %638 = vmatpush.bf16.msra.mxu0 %v617
        %639 = vmatpush.bf16.msra.mxu0 %v615
        %640 = vmatpush.bf16.msra.mxu0 %v613
        %641 = vmatpush.bf16.msra.mxu0 %v611
        %642 = vmatpush.bf16.msra.mxu0 %v609
        %643 = vmatpush.bf16.msra.mxu0 %v607
        %644 = vmatpush.bf16.msra.mxu0 %v605
        %645 = vmatmul.bf16.gmra.mxu0 %v519
        %v646 = vpop.f32.mrf.mxu0
        %v647 = vadd.f32 %v553, %v646
        %v648 = vpop.f32.mrf.mxu0
        %v649 = vadd.f32 %v553, %v648
        %650 = vmatmul.bf16.gmra.mxu0 %v520
        %v651 = vpop.f32.mrf.mxu0
        %v652 = vadd.f32 %v553, %v651
        %v653 = vpop.f32.mrf.mxu0
        %v654 = vadd.f32 %v553, %v653
        %655 = vmatmul.bf16.gmra.mxu0 %v521
        %v656 = vpop.f32.mrf.mxu0
        %v657 = vadd.f32 %v553, %v656
        %v658 = vpop.f32.mrf.mxu0
        %v659 = vadd.f32 %v553, %v658
        %660 = vmatmul.bf16.gmra.mxu0 %v522
        %v661 = vpop.f32.mrf.mxu0
        %v662 = vadd.f32 %v553, %v661
        %v663 = vpop.f32.mrf.mxu0
        %v664 = vadd.f32 %v553, %v663
        %665 = vmatmul.bf16.gmra.mxu0 %v523
        %v666 = vpop.f32.mrf.mxu0
        %v667 = vadd.f32 %v553, %v666
        %v668 = vpop.f32.mrf.mxu0
        %v669 = vadd.f32 %v553, %v668
        %670 = vmatmul.bf16.gmra.mxu0 %v524
        %v671 = vpop.f32.mrf.mxu0
        %v672 = vadd.f32 %v553, %v671
        %v673 = vpop.f32.mrf.mxu0
        %v674 = vadd.f32 %v553, %v673
        %675 = vmatmul.bf16.gmra.mxu0 %v525
        %v676 = vpop.f32.mrf.mxu0
        %v677 = vadd.f32 %v553, %v676
        %v678 = vpop.f32.mrf.mxu0
        %v679 = vadd.f32 %v553, %v678
        %680 = vmatmul.bf16.gmra.mxu0 %v526
        %v681 = vpop.f32.mrf.mxu0
        %v682 = vadd.f32 %v553, %v681
        %v683 = vpop.f32.mrf.mxu0
        %v684 = vadd.f32 %v553, %v683
        %685 = vmatmul.bf16.gmra.mxu0 %v527
        %v686 = vpop.f32.mrf.mxu0
        %v687 = vadd.f32 %v553, %v686
        %v688 = vpop.f32.mrf.mxu0
        %v689 = vadd.f32 %v553, %v688
        %690 = vmatmul.bf16.gmra.mxu0 %v528
        %v691 = vpop.f32.mrf.mxu0
        %v692 = vadd.f32 %v553, %v691
        %v693 = vpop.f32.mrf.mxu0
        %v694 = vadd.f32 %v553, %v693
        %695 = vmatmul.bf16.gmra.mxu0 %v529
        %v696 = vpop.f32.mrf.mxu0
        %v697 = vadd.f32 %v553, %v696
        %v698 = vpop.f32.mrf.mxu0
        %v699 = vadd.f32 %v553, %v698
        %700 = vmatmul.bf16.gmra.mxu0 %v530
        %v701 = vpop.f32.mrf.mxu0
        %v702 = vadd.f32 %v553, %v701
        %v703 = vpop.f32.mrf.mxu0
        %v704 = vadd.f32 %v553, %v703
        %705 = vmatmul.bf16.gmra.mxu0 %v531
        %v706 = vpop.f32.mrf.mxu0
        %v707 = vadd.f32 %v553, %v706
        %v708 = vpop.f32.mrf.mxu0
        %v709 = vadd.f32 %v553, %v708
        %710 = vmatmul.bf16.gmra.mxu0 %v532
        %v711 = vpop.f32.mrf.mxu0
        %v712 = vadd.f32 %v553, %v711
        %v713 = vpop.f32.mrf.mxu0
        %v714 = vadd.f32 %v553, %v713
        %715 = vmatmul.bf16.gmra.mxu0 %v533
        %v716 = vpop.f32.mrf.mxu0
        %v717 = vadd.f32 %v553, %v716
        %v718 = vpop.f32.mrf.mxu0
        %v719 = vadd.f32 %v553, %v718
        %720 = vmatmul.bf16.gmra.mxu0 %v534
        %v721 = vpop.f32.mrf.mxu0
        %v722 = vadd.f32 %v553, %v721
        %v723 = vpop.f32.mrf.mxu0
        %v724 = vadd.f32 %v553, %v723
        %725 = vdwg.mxu0
        %726 = vmatpush.bf16.msra.mxu0 %v620
        %727 = vmatpush.bf16.msra.mxu0 %v618
        %728 = vmatpush.bf16.msra.mxu0 %v616
        %729 = vmatpush.bf16.msra.mxu0 %v614
        %730 = vmatpush.bf16.msra.mxu0 %v612
        %731 = vmatpush.bf16.msra.mxu0 %v610
        %732 = vmatpush.bf16.msra.mxu0 %v608
        %733 = vmatpush.bf16.msra.mxu0 %v606
        %734 = vmatmul.bf16.gmra.mxu0 %v519
        %v735 = vpop.f32.mrf.mxu0
        %v736 = vadd.f32 %v554, %v735
        %v737 = vpop.f32.mrf.mxu0
        %v738 = vadd.f32 %v554, %v737
        %739 = vmatmul.bf16.gmra.mxu0 %v520
        %v740 = vpop.f32.mrf.mxu0
        %v741 = vadd.f32 %v554, %v740
        %v742 = vpop.f32.mrf.mxu0
        %v743 = vadd.f32 %v554, %v742
        %744 = vmatmul.bf16.gmra.mxu0 %v521
        %v745 = vpop.f32.mrf.mxu0
        %v746 = vadd.f32 %v554, %v745
        %v747 = vpop.f32.mrf.mxu0
        %v748 = vadd.f32 %v554, %v747
        %749 = vmatmul.bf16.gmra.mxu0 %v522
        %v750 = vpop.f32.mrf.mxu0
        %v751 = vadd.f32 %v554, %v750
        %v752 = vpop.f32.mrf.mxu0
        %v753 = vadd.f32 %v554, %v752
        %754 = vmatmul.bf16.gmra.mxu0 %v523
        %v755 = vpop.f32.mrf.mxu0
        %v756 = vadd.f32 %v554, %v755
        %v757 = vpop.f32.mrf.mxu0
        %v758 = vadd.f32 %v554, %v757
        %759 = vmatmul.bf16.gmra.mxu0 %v524
        %v760 = vpop.f32.mrf.mxu0
        %v761 = vadd.f32 %v554, %v760
        %v762 = vpop.f32.mrf.mxu0
        %v763 = vadd.f32 %v554, %v762
        %764 = vmatmul.bf16.gmra.mxu0 %v525
        %v765 = vpop.f32.mrf.mxu0
        %v766 = vadd.f32 %v554, %v765
        %v767 = vpop.f32.mrf.mxu0
        %v768 = vadd.f32 %v554, %v767
        %769 = vmatmul.bf16.gmra.mxu0 %v526
        %v770 = vpop.f32.mrf.mxu0
        %v771 = vadd.f32 %v554, %v770
        %v772 = vpop.f32.mrf.mxu0
        %v773 = vadd.f32 %v554, %v772
        %774 = vmatmul.bf16.gmra.mxu0 %v527
        %v775 = vpop.f32.mrf.mxu0
        %v776 = vadd.f32 %v554, %v775
        %v777 = vpop.f32.mrf.mxu0
        %v778 = vadd.f32 %v554, %v777
        %779 = vmatmul.bf16.gmra.mxu0 %v528
        %v780 = vpop.f32.mrf.mxu0
        %v781 = vadd.f32 %v554, %v780
        %v782 = vpop.f32.mrf.mxu0
        %v783 = vadd.f32 %v554, %v782
        %784 = vmatmul.bf16.gmra.mxu0 %v529
        %v785 = vpop.f32.mrf.mxu0
        %v786 = vadd.f32 %v554, %v785
        %v787 = vpop.f32.mrf.mxu0
        %v788 = vadd.f32 %v554, %v787
        %789 = vmatmul.bf16.gmra.mxu0 %v530
        %v790 = vpop.f32.mrf.mxu0
        %v791 = vadd.f32 %v554, %v790
        %v792 = vpop.f32.mrf.mxu0
        %v793 = vadd.f32 %v554, %v792
        %794 = vmatmul.bf16.gmra.mxu0 %v531
        %v795 = vpop.f32.mrf.mxu0
        %v796 = vadd.f32 %v554, %v795
        %v797 = vpop.f32.mrf.mxu0
        %v798 = vadd.f32 %v554, %v797
        %799 = vmatmul.bf16.gmra.mxu0 %v532
        %v800 = vpop.f32.mrf.mxu0
        %v801 = vadd.f32 %v554, %v800
        %v802 = vpop.f32.mrf.mxu0
        %v803 = vadd.f32 %v554, %v802
        %804 = vmatmul.bf16.gmra.mxu0 %v533
        %v805 = vpop.f32.mrf.mxu0
        %v806 = vadd.f32 %v554, %v805
        %v807 = vpop.f32.mrf.mxu0
        %v808 = vadd.f32 %v554, %v807
        %809 = vmatmul.bf16.gmra.mxu0 %v534
        %v810 = vpop.f32.mrf.mxu0
        %v811 = vadd.f32 %v554, %v810
        %v812 = vpop.f32.mrf.mxu0
        %v813 = vadd.f32 %v554, %v812
        %814 = vdwg.mxu0
        %v815 = vmax.f32 %v647, 0.0
        %v816 = vmax.f32 %v736, 0.0
        %v817 = vmax.f32 %v649, 0.0
        %v818 = vmax.f32 %v738, 0.0
        %v819 = vmax.f32 %v652, 0.0
        %v820 = vmax.f32 %v741, 0.0
        %v821 = vmax.f32 %v654, 0.0
        %v822 = vmax.f32 %v743, 0.0
        %v823 = vmax.f32 %v657, 0.0
        %v824 = vmax.f32 %v746, 0.0
        %v825 = vmax.f32 %v659, 0.0
        %v826 = vmax.f32 %v748, 0.0
        %v827 = vmax.f32 %v662, 0.0
        %v828 = vmax.f32 %v751, 0.0
        %v829 = vmax.f32 %v664, 0.0
        %v830 = vmax.f32 %v753, 0.0
        %v831 = vmax.f32 %v667, 0.0
        %v832 = vmax.f32 %v756, 0.0
        %v833 = vmax.f32 %v669, 0.0
        %v834 = vmax.f32 %v758, 0.0
        %v835 = vmax.f32 %v672, 0.0
        %v836 = vmax.f32 %v761, 0.0
        %v837 = vmax.f32 %v674, 0.0
        %v838 = vmax.f32 %v763, 0.0
        %v839 = vmax.f32 %v677, 0.0
        %v840 = vmax.f32 %v766, 0.0
        %v841 = vmax.f32 %v679, 0.0
        %v842 = vmax.f32 %v768, 0.0
        %v843 = vmax.f32 %v682, 0.0
        %v844 = vmax.f32 %v771, 0.0
        %v845 = vmax.f32 %v684, 0.0
        %v846 = vmax.f32 %v773, 0.0
        %v847 = vmax.f32 %v687, 0.0
        %v848 = vmax.f32 %v776, 0.0
        %v849 = vmax.f32 %v689, 0.0
        %v850 = vmax.f32 %v778, 0.0
        %v851 = vmax.f32 %v692, 0.0
        %v852 = vmax.f32 %v781, 0.0
        %v853 = vmax.f32 %v694, 0.0
        %v854 = vmax.f32 %v783, 0.0
        %v855 = vmax.f32 %v697, 0.0
        %v856 = vmax.f32 %v786, 0.0
        %v857 = vmax.f32 %v699, 0.0
        %v858 = vmax.f32 %v788, 0.0
        %v859 = vmax.f32 %v702, 0.0
        %v860 = vmax.f32 %v791, 0.0
        %v861 = vmax.f32 %v704, 0.0
        %v862 = vmax.f32 %v793, 0.0
        %v863 = vmax.f32 %v707, 0.0
        %v864 = vmax.f32 %v796, 0.0
        %v865 = vmax.f32 %v709, 0.0
        %v866 = vmax.f32 %v798, 0.0
        %v867 = vmax.f32 %v712, 0.0
        %v868 = vmax.f32 %v801, 0.0
        %v869 = vmax.f32 %v714, 0.0
        %v870 = vmax.f32 %v803, 0.0
        %v871 = vmax.f32 %v717, 0.0
        %v872 = vmax.f32 %v806, 0.0
        %v873 = vmax.f32 %v719, 0.0
        %v874 = vmax.f32 %v808, 0.0
        %v875 = vmax.f32 %v722, 0.0
        %v876 = vmax.f32 %v811, 0.0
        %v877 = vmax.f32 %v724, 0.0
        %v878 = vmax.f32 %v813, 0.0
        %v879 = vpack.c.bf16 %v817, %v815
        %v880 = vpack.c.bf16 %v818, %v816
        %v881 = vpack.c.bf16 %v821, %v819
        %v882 = vpack.c.bf16 %v822, %v820
        %v883 = vpack.c.bf16 %v825, %v823
        %v884 = vpack.c.bf16 %v826, %v824
        %v885 = vpack.c.bf16 %v829, %v827
        %v886 = vpack.c.bf16 %v830, %v828
        %v887 = vpack.c.bf16 %v833, %v831
        %v888 = vpack.c.bf16 %v834, %v832
        %v889 = vpack.c.bf16 %v837, %v835
        %v890 = vpack.c.bf16 %v838, %v836
        %v891 = vpack.c.bf16 %v841, %v839
        %v892 = vpack.c.bf16 %v842, %v840
        %v893 = vpack.c.bf16 %v845, %v843
        %v894 = vpack.c.bf16 %v846, %v844
        %v895 = vpack.c.bf16 %v849, %v847
        %v896 = vpack.c.bf16 %v850, %v848
        %v897 = vpack.c.bf16 %v853, %v851
        %v898 = vpack.c.bf16 %v854, %v852
        %v899 = vpack.c.bf16 %v857, %v855
        %v900 = vpack.c.bf16 %v858, %v856
        %v901 = vpack.c.bf16 %v861, %v859
        %v902 = vpack.c.bf16 %v862, %v860
        %v903 = vpack.c.bf16 %v865, %v863
        %v904 = vpack.c.bf16 %v866, %v864
        %v905 = vpack.c.bf16 %v869, %v867
        %v906 = vpack.c.bf16 %v870, %v868
        %v907 = vpack.c.bf16 %v873, %v871
        %v908 = vpack.c.bf16 %v874, %v872
        %v909 = vpack.c.bf16 %v877, %v875
        %v910 = vpack.c.bf16 %v878, %v876
        %v911 = vld [vmem:[%s3] sm:$0xff]
        %v912 = vld [vmem:[%s3 + $0x8] sm:$0xff]
        %v913 = vld [vmem:[%s3 + $0x10] sm:$0xff]
        %v914 = vld [vmem:[%s3 + $0x18] sm:$0xff]
        %v915 = vld [vmem:[%s3 + $0x20] sm:$0xff]
        %v916 = vld [vmem:[%s3 + $0x28] sm:$0xff]
        %v917 = vld [vmem:[%s3 + $0x30] sm:$0xff]
        %v918 = vld [vmem:[%s3 + $0x38] sm:$0xff]
        %v919 = vld [vmem:[%s3 + $0x40] sm:$0xff]
        %v920 = vld [vmem:[%s3 + $0x48] sm:$0xff]
        %v921 = vld [vmem:[%s3 + $0x50] sm:$0xff]
        %v922 = vld [vmem:[%s3 + $0x58] sm:$0xff]
        %v923 = vld [vmem:[%s3 + $0x60] sm:$0xff]
        %v924 = vld [vmem:[%s3 + $0x68] sm:$0xff]
        %v925 = vld [vmem:[%s3 + $0x70] sm:$0xff]
        %v926 = vld [vmem:[%s3 + $0x78] sm:$0xff]
        %v927 = vld [vmem:[%s3 + $0x80] sm:$0xff]
        %v928 = vld [vmem:[%s3 + $0x88] sm:$0xff]
        %v929 = vld [vmem:[%s3 + $0x90] sm:$0xff]
        %v930 = vld [vmem:[%s3 + $0x98] sm:$0xff]
        %v931 = vld [vmem:[%s3 + $0xa0] sm:$0xff]
        %v932 = vld [vmem:[%s3 + $0xa8] sm:$0xff]
        %v933 = vld [vmem:[%s3 + $0xb0] sm:$0xff]
        %v934 = vld [vmem:[%s3 + $0xb8] sm:$0xff]
        %v935 = vld [vmem:[%s3 + $0xc0] sm:$0xff]
        %v936 = vld [vmem:[%s3 + $0xc8] sm:$0xff]
        %v937 = vld [vmem:[%s3 + $0xd0] sm:$0xff]
        %v938 = vld [vmem:[%s3 + $0xd8] sm:$0xff]
        %v939 = vld [vmem:[%s3 + $0xe0] sm:$0xff]
        %v940 = vld [vmem:[%s3 + $0xe8] sm:$0xff]
        %v941 = vld [vmem:[%s3 + $0xf0] sm:$0xff]
        %v942 = vld [vmem:[%s3 + $0xf8] sm:$0xff]
        %v943 = vld [vmem:[%s4] sm:$0x3]
        %v945 = vperm.slane %v943, 0
        %v946 = vperm.slane %v943, 1
        %v981 = vunpack.c.l.b16 %v911
        %v982 = vunpack.c.h.b16 %v911
        %v983 = vunpack.c.l.b16 %v912
        %v984 = vunpack.c.h.b16 %v912
        %v985 = vunpack.c.l.b16 %v913
        %v986 = vunpack.c.h.b16 %v913
        %v987 = vunpack.c.l.b16 %v914
        %v988 = vunpack.c.h.b16 %v914
        %v989 = vunpack.c.l.b16 %v915
        %v990 = vunpack.c.h.b16 %v915
        %v991 = vunpack.c.l.b16 %v916
        %v992 = vunpack.c.h.b16 %v916
        %v993 = vunpack.c.l.b16 %v917
        %v994 = vunpack.c.h.b16 %v917
        %v995 = vunpack.c.l.b16 %v918
        %v996 = vunpack.c.h.b16 %v918
        %v997 = vunpack.c.l.b16 %v919
        %v998 = vunpack.c.h.b16 %v919
        %v999 = vunpack.c.l.b16 %v920
        %v1000 = vunpack.c.h.b16 %v920
        %v1001 = vunpack.c.l.b16 %v921
        %v1002 = vunpack.c.h.b16 %v921
        %v1003 = vunpack.c.l.b16 %v922
        %v1004 = vunpack.c.h.b16 %v922
        %v1005 = vunpack.c.l.b16 %v923
        %v1006 = vunpack.c.h.b16 %v923
        %v1007 = vunpack.c.l.b16 %v924
        %v1008 = vunpack.c.h.b16 %v924
        %v1009 = vunpack.c.l.b16 %v925
        %v1010 = vunpack.c.h.b16 %v925
        %v1011 = vunpack.c.l.b16 %v926
        %v1012 = vunpack.c.h.b16 %v926
        %v1013 = vunpack.c.l.b16 %v927
        %v1014 = vunpack.c.h.b16 %v927
        %v1015 = vunpack.c.l.b16 %v928
        %v1016 = vunpack.c.h.b16 %v928
        %v1017 = vunpack.c.l.b16 %v929
        %v1018 = vunpack.c.h.b16 %v929
        %v1019 = vunpack.c.l.b16 %v930
        %v1020 = vunpack.c.h.b16 %v930
        %v1021 = vunpack.c.l.b16 %v931
        %v1022 = vunpack.c.h.b16 %v931
        %v1023 = vunpack.c.l.b16 %v932
        %v1024 = vunpack.c.h.b16 %v932
        %v1025 = vunpack.c.l.b16 %v933
        %v1026 = vunpack.c.h.b16 %v933
        %v1027 = vunpack.c.l.b16 %v934
        %v1028 = vunpack.c.h.b16 %v934
        %v1029 = vunpack.c.l.b16 %v935
        %v1030 = vunpack.c.h.b16 %v935
        %v1031 = vunpack.c.l.b16 %v936
        %v1032 = vunpack.c.h.b16 %v936
        %v1033 = vunpack.c.l.b16 %v937
        %v1034 = vunpack.c.h.b16 %v937
        %v1035 = vunpack.c.l.b16 %v938
        %v1036 = vunpack.c.h.b16 %v938
        %v1037 = vunpack.c.l.b16 %v939
        %v1038 = vunpack.c.h.b16 %v939
        %v1039 = vunpack.c.l.b16 %v940
        %v1040 = vunpack.c.h.b16 %v940
        %v1041 = vunpack.c.l.b16 %v941
        %v1042 = vunpack.c.h.b16 %v941
        %v1043 = vunpack.c.l.b16 %v942
        %v1044 = vunpack.c.h.b16 %v942
        %v1045 = vpack.c.b16 %v983, %v981
        %v1046 = vpack.c.b16 %v984, %v982
        %v1047 = vpack.c.b16 %v987, %v985
        %v1048 = vpack.c.b16 %v988, %v986
        %v1049 = vpack.c.b16 %v991, %v989
        %v1050 = vpack.c.b16 %v992, %v990
        %v1051 = vpack.c.b16 %v995, %v993
        %v1052 = vpack.c.b16 %v996, %v994
        %v1053 = vpack.c.b16 %v999, %v997
        %v1054 = vpack.c.b16 %v1000, %v998
        %v1055 = vpack.c.b16 %v1003, %v1001
        %v1056 = vpack.c.b16 %v1004, %v1002
        %v1057 = vpack.c.b16 %v1007, %v1005
        %v1058 = vpack.c.b16 %v1008, %v1006
        %v1059 = vpack.c.b16 %v1011, %v1009
        %v1060 = vpack.c.b16 %v1012, %v1010
        %v1061 = vpack.c.b16 %v1015, %v1013
        %v1062 = vpack.c.b16 %v1016, %v1014
        %v1063 = vpack.c.b16 %v1019, %v1017
        %v1064 = vpack.c.b16 %v1020, %v1018
        %v1065 = vpack.c.b16 %v1023, %v1021
        %v1066 = vpack.c.b16 %v1024, %v1022
        %v1067 = vpack.c.b16 %v1027, %v1025
        %v1068 = vpack.c.b16 %v1028, %v1026
        %v1069 = vpack.c.b16 %v1031, %v1029
        %v1070 = vpack.c.b16 %v1032, %v1030
        %v1071 = vpack.c.b16 %v1035, %v1033
        %v1072 = vpack.c.b16 %v1036, %v1034
        %v1073 = vpack.c.b16 %v1039, %v1037
        %v1074 = vpack.c.b16 %v1040, %v1038
        %v1075 = vpack.c.b16 %v1043, %v1041
        %v1076 = vpack.c.b16 %v1044, %v1042
        %1109 = vmatpush.bf16.msra.mxu0 %v1059
        %1110 = vmatpush.bf16.msra.mxu0 %v1057
        %1111 = vmatpush.bf16.msra.mxu0 %v1055
        %1112 = vmatpush.bf16.msra.mxu0 %v1053
        %1113 = vmatpush.bf16.msra.mxu0 %v1051
        %1114 = vmatpush.bf16.msra.mxu0 %v1049
        %1115 = vmatpush.bf16.msra.mxu0 %v1047
        %1116 = vmatpush.bf16.msra.mxu0 %v1045
        %1117 = vmatmul.bf16.gmra.mxu0 %v879
        %v1118 = vpop.f32.mrf.mxu0
        %v1119 = vadd.f32 %v945, %v1118
        %v1120 = vpop.f32.mrf.mxu0
        %v1121 = vadd.f32 %v945, %v1120
        %1122 = vmatmul.bf16.gmra.mxu0 %v881
        %v1123 = vpop.f32.mrf.mxu0
        %v1124 = vadd.f32 %v945, %v1123
        %v1125 = vpop.f32.mrf.mxu0
        %v1126 = vadd.f32 %v945, %v1125
        %1127 = vmatmul.bf16.gmra.mxu0 %v883
        %v1128 = vpop.f32.mrf.mxu0
        %v1129 = vadd.f32 %v945, %v1128
        %v1130 = vpop.f32.mrf.mxu0
        %v1131 = vadd.f32 %v945, %v1130
        %1132 = vmatmul.bf16.gmra.mxu0 %v885
        %v1133 = vpop.f32.mrf.mxu0
        %v1134 = vadd.f32 %v945, %v1133
        %v1135 = vpop.f32.mrf.mxu0
        %v1136 = vadd.f32 %v945, %v1135
        %1137 = vmatmul.bf16.gmra.mxu0 %v887
        %v1138 = vpop.f32.mrf.mxu0
        %v1139 = vadd.f32 %v945, %v1138
        %v1140 = vpop.f32.mrf.mxu0
        %v1141 = vadd.f32 %v945, %v1140
        %1142 = vmatmul.bf16.gmra.mxu0 %v889
        %v1143 = vpop.f32.mrf.mxu0
        %v1144 = vadd.f32 %v945, %v1143
        %v1145 = vpop.f32.mrf.mxu0
        %v1146 = vadd.f32 %v945, %v1145
        %1147 = vmatmul.bf16.gmra.mxu0 %v891
        %v1148 = vpop.f32.mrf.mxu0
        %v1149 = vadd.f32 %v945, %v1148
        %v1150 = vpop.f32.mrf.mxu0
        %v1151 = vadd.f32 %v945, %v1150
        %1152 = vmatmul.bf16.gmra.mxu0 %v893
        %v1153 = vpop.f32.mrf.mxu0
        %v1154 = vadd.f32 %v945, %v1153
        %v1155 = vpop.f32.mrf.mxu0
        %v1156 = vadd.f32 %v945, %v1155
        %1157 = vmatmul.bf16.gmra.mxu0 %v895
        %v1158 = vpop.f32.mrf.mxu0
        %v1159 = vadd.f32 %v945, %v1158
        %v1160 = vpop.f32.mrf.mxu0
        %v1161 = vadd.f32 %v945, %v1160
        %1162 = vmatmul.bf16.gmra.mxu0 %v897
        %v1163 = vpop.f32.mrf.mxu0
        %v1164 = vadd.f32 %v945, %v1163
        %v1165 = vpop.f32.mrf.mxu0
        %v1166 = vadd.f32 %v945, %v1165
        %1167 = vmatmul.bf16.gmra.mxu0 %v899
        %v1168 = vpop.f32.mrf.mxu0
        %v1169 = vadd.f32 %v945, %v1168
        %v1170 = vpop.f32.mrf.mxu0
        %v1171 = vadd.f32 %v945, %v1170
        %1172 = vmatmul.bf16.gmra.mxu0 %v901
        %v1173 = vpop.f32.mrf.mxu0
        %v1174 = vadd.f32 %v945, %v1173
        %v1175 = vpop.f32.mrf.mxu0
        %v1176 = vadd.f32 %v945, %v1175
        %1177 = vmatmul.bf16.gmra.mxu0 %v903
        %v1178 = vpop.f32.mrf.mxu0
        %v1179 = vadd.f32 %v945, %v1178
        %v1180 = vpop.f32.mrf.mxu0
        %v1181 = vadd.f32 %v945, %v1180
        %1182 = vmatmul.bf16.gmra.mxu0 %v905
        %v1183 = vpop.f32.mrf.mxu0
        %v1184 = vadd.f32 %v945, %v1183
        %v1185 = vpop.f32.mrf.mxu0
        %v1186 = vadd.f32 %v945, %v1185
        %1187 = vmatmul.bf16.gmra.mxu0 %v907
        %v1188 = vpop.f32.mrf.mxu0
        %v1189 = vadd.f32 %v945, %v1188
        %v1190 = vpop.f32.mrf.mxu0
        %v1191 = vadd.f32 %v945, %v1190
        %1192 = vmatmul.bf16.gmra.mxu0 %v909
        %v1193 = vpop.f32.mrf.mxu0
        %v1194 = vadd.f32 %v945, %v1193
        %v1195 = vpop.f32.mrf.mxu0
        %v1196 = vadd.f32 %v945, %v1195
        %1197 = vdwg.mxu0
        %1198 = vmatpush.bf16.msra.mxu0 %v1075
        %1199 = vmatpush.bf16.msra.mxu0 %v1073
        %1200 = vmatpush.bf16.msra.mxu0 %v1071
        %1201 = vmatpush.bf16.msra.mxu0 %v1069
        %1202 = vmatpush.bf16.msra.mxu0 %v1067
        %1203 = vmatpush.bf16.msra.mxu0 %v1065
        %1204 = vmatpush.bf16.msra.mxu0 %v1063
        %1205 = vmatpush.bf16.msra.mxu0 %v1061
        %1206 = vmatmul.bf16.gmra.mxu0 %v880
        %v1207 = vpop.f32.mrf.mxu0
        %v1208 = vadd.f32 %v1119, %v1207
        %v1209 = vpop.f32.mrf.mxu0
        %v1210 = vadd.f32 %v1121, %v1209
        %1211 = vmatmul.bf16.gmra.mxu0 %v882
        %v1212 = vpop.f32.mrf.mxu0
        %v1213 = vadd.f32 %v1124, %v1212
        %v1214 = vpop.f32.mrf.mxu0
        %v1215 = vadd.f32 %v1126, %v1214
        %1216 = vmatmul.bf16.gmra.mxu0 %v884
        %v1217 = vpop.f32.mrf.mxu0
        %v1218 = vadd.f32 %v1129, %v1217
        %v1219 = vpop.f32.mrf.mxu0
        %v1220 = vadd.f32 %v1131, %v1219
        %1221 = vmatmul.bf16.gmra.mxu0 %v886
        %v1222 = vpop.f32.mrf.mxu0
        %v1223 = vadd.f32 %v1134, %v1222
        %v1224 = vpop.f32.mrf.mxu0
        %v1225 = vadd.f32 %v1136, %v1224
        %1226 = vmatmul.bf16.gmra.mxu0 %v888
        %v1227 = vpop.f32.mrf.mxu0
        %v1228 = vadd.f32 %v1139, %v1227
        %v1229 = vpop.f32.mrf.mxu0
        %v1230 = vadd.f32 %v1141, %v1229
        %1231 = vmatmul.bf16.gmra.mxu0 %v890
        %v1232 = vpop.f32.mrf.mxu0
        %v1233 = vadd.f32 %v1144, %v1232
        %v1234 = vpop.f32.mrf.mxu0
        %v1235 = vadd.f32 %v1146, %v1234
        %1236 = vmatmul.bf16.gmra.mxu0 %v892
        %v1237 = vpop.f32.mrf.mxu0
        %v1238 = vadd.f32 %v1149, %v1237
        %v1239 = vpop.f32.mrf.mxu0
        %v1240 = vadd.f32 %v1151, %v1239
        %1241 = vmatmul.bf16.gmra.mxu0 %v894
        %v1242 = vpop.f32.mrf.mxu0
        %v1243 = vadd.f32 %v1154, %v1242
        %v1244 = vpop.f32.mrf.mxu0
        %v1245 = vadd.f32 %v1156, %v1244
        %1246 = vmatmul.bf16.gmra.mxu0 %v896
        %v1247 = vpop.f32.mrf.mxu0
        %v1248 = vadd.f32 %v1159, %v1247
        %v1249 = vpop.f32.mrf.mxu0
        %v1250 = vadd.f32 %v1161, %v1249
        %1251 = vmatmul.bf16.gmra.mxu0 %v898
        %v1252 = vpop.f32.mrf.mxu0
        %v1253 = vadd.f32 %v1164, %v1252
        %v1254 = vpop.f32.mrf.mxu0
        %v1255 = vadd.f32 %v1166, %v1254
        %1256 = vmatmul.bf16.gmra.mxu0 %v900
        %v1257 = vpop.f32.mrf.mxu0
        %v1258 = vadd.f32 %v1169, %v1257
        %v1259 = vpop.f32.mrf.mxu0
        %v1260 = vadd.f32 %v1171, %v1259
        %1261 = vmatmul.bf16.gmra.mxu0 %v902
        %v1262 = vpop.f32.mrf.mxu0
        %v1263 = vadd.f32 %v1174, %v1262
        %v1264 = vpop.f32.mrf.mxu0
        %v1265 = vadd.f32 %v1176, %v1264
        %1266 = vmatmul.bf16.gmra.mxu0 %v904
        %v1267 = vpop.f32.mrf.mxu0
        %v1268 = vadd.f32 %v1179, %v1267
        %v1269 = vpop.f32.mrf.mxu0
        %v1270 = vadd.f32 %v1181, %v1269
        %1271 = vmatmul.bf16.gmra.mxu0 %v906
        %v1272 = vpop.f32.mrf.mxu0
        %v1273 = vadd.f32 %v1184, %v1272
        %v1274 = vpop.f32.mrf.mxu0
        %v1275 = vadd.f32 %v1186, %v1274
        %1276 = vmatmul.bf16.gmra.mxu0 %v908
        %v1277 = vpop.f32.mrf.mxu0
        %v1278 = vadd.f32 %v1189, %v1277
        %v1279 = vpop.f32.mrf.mxu0
        %v1280 = vadd.f32 %v1191, %v1279
        %1281 = vmatmul.bf16.gmra.mxu0 %v910
        %v1282 = vpop.f32.mrf.mxu0
        %v1283 = vadd.f32 %v1194, %v1282
        %v1284 = vpop.f32.mrf.mxu0
        %v1285 = vadd.f32 %v1196, %v1284
        %1286 = vdwg.mxu0
        %1287 = vmatpush.bf16.msra.mxu0 %v1060
        %1288 = vmatpush.bf16.msra.mxu0 %v1058
        %1289 = vmatpush.bf16.msra.mxu0 %v1056
        %1290 = vmatpush.bf16.msra.mxu0 %v1054
        %1291 = vmatpush.bf16.msra.mxu0 %v1052
        %1292 = vmatpush.bf16.msra.mxu0 %v1050
        %1293 = vmatpush.bf16.msra.mxu0 %v1048
        %1294 = vmatpush.bf16.msra.mxu0 %v1046
        %1295 = vmatmul.bf16.gmra.mxu0 %v879
        %v1296 = vpop.f32.mrf.mxu0
        %v1297 = vadd.f32 %v946, %v1296
        %v1298 = vpop.f32.mrf.mxu0
        %v1299 = vadd.f32 %v946, %v1298
        %1300 = vmatmul.bf16.gmra.mxu0 %v881
        %v1301 = vpop.f32.mrf.mxu0
        %v1302 = vadd.f32 %v946, %v1301
        %v1303 = vpop.f32.mrf.mxu0
        %v1304 = vadd.f32 %v946, %v1303
        %1305 = vmatmul.bf16.gmra.mxu0 %v883
        %v1306 = vpop.f32.mrf.mxu0
        %v1307 = vadd.f32 %v946, %v1306
        %v1308 = vpop.f32.mrf.mxu0
        %v1309 = vadd.f32 %v946, %v1308
        %1310 = vmatmul.bf16.gmra.mxu0 %v885
        %v1311 = vpop.f32.mrf.mxu0
        %v1312 = vadd.f32 %v946, %v1311
        %v1313 = vpop.f32.mrf.mxu0
        %v1314 = vadd.f32 %v946, %v1313
        %1315 = vmatmul.bf16.gmra.mxu0 %v887
        %v1316 = vpop.f32.mrf.mxu0
        %v1317 = vadd.f32 %v946, %v1316
        %v1318 = vpop.f32.mrf.mxu0
        %v1319 = vadd.f32 %v946, %v1318
        %1320 = vmatmul.bf16.gmra.mxu0 %v889
        %v1321 = vpop.f32.mrf.mxu0
        %v1322 = vadd.f32 %v946, %v1321
        %v1323 = vpop.f32.mrf.mxu0
        %v1324 = vadd.f32 %v946, %v1323
        %1325 = vmatmul.bf16.gmra.mxu0 %v891
        %v1326 = vpop.f32.mrf.mxu0
        %v1327 = vadd.f32 %v946, %v1326
        %v1328 = vpop.f32.mrf.mxu0
        %v1329 = vadd.f32 %v946, %v1328
        %1330 = vmatmul.bf16.gmra.mxu0 %v893
        %v1331 = vpop.f32.mrf.mxu0
        %v1332 = vadd.f32 %v946, %v1331
        %v1333 = vpop.f32.mrf.mxu0
        %v1334 = vadd.f32 %v946, %v1333
        %1335 = vmatmul.bf16.gmra.mxu0 %v895
        %v1336 = vpop.f32.mrf.mxu0
        %v1337 = vadd.f32 %v946, %v1336
        %v1338 = vpop.f32.mrf.mxu0
        %v1339 = vadd.f32 %v946, %v1338
        %1340 = vmatmul.bf16.gmra.mxu0 %v897
        %v1341 = vpop.f32.mrf.mxu0
        %v1342 = vadd.f32 %v946, %v1341
        %v1343 = vpop.f32.mrf.mxu0
        %v1344 = vadd.f32 %v946, %v1343
        %1345 = vmatmul.bf16.gmra.mxu0 %v899
        %v1346 = vpop.f32.mrf.mxu0
        %v1347 = vadd.f32 %v946, %v1346
        %v1348 = vpop.f32.mrf.mxu0
        %v1349 = vadd.f32 %v946, %v1348
        %1350 = vmatmul.bf16.gmra.mxu0 %v901
        %v1351 = vpop.f32.mrf.mxu0
        %v1352 = vadd.f32 %v946, %v1351
        %v1353 = vpop.f32.mrf.mxu0
        %v1354 = vadd.f32 %v946, %v1353
        %1355 = vmatmul.bf16.gmra.mxu0 %v903
        %v1356 = vpop.f32.mrf.mxu0
        %v1357 = vadd.f32 %v946, %v1356
        %v1358 = vpop.f32.mrf.mxu0
        %v1359 = vadd.f32 %v946, %v1358
        %1360 = vmatmul.bf16.gmra.mxu0 %v905
        %v1361 = vpop.f32.mrf.mxu0
        %v1362 = vadd.f32 %v946, %v1361
        %v1363 = vpop.f32.mrf.mxu0
        %v1364 = vadd.f32 %v946, %v1363
        %1365 = vmatmul.bf16.gmra.mxu0 %v907
        %v1366 = vpop.f32.mrf.mxu0
        %v1367 = vadd.f32 %v946, %v1366
        %v1368 = vpop.f32.mrf.mxu0
        %v1369 = vadd.f32 %v946, %v1368
        %1370 = vmatmul.bf16.gmra.mxu0 %v909
        %v1371 = vpop.f32.mrf.mxu0
        %v1372 = vadd.f32 %v946, %v1371
        %v1373 = vpop.f32.mrf.mxu0
        %v1374 = vadd.f32 %v946, %v1373
        %1375 = vdwg.mxu0
        %1376 = vmatpush.bf16.msra.mxu0 %v1076
        %1377 = vmatpush.bf16.msra.mxu0 %v1074
        %1378 = vmatpush.bf16.msra.mxu0 %v1072
        %1379 = vmatpush.bf16.msra.mxu0 %v1070
        %1380 = vmatpush.bf16.msra.mxu0 %v1068
        %1381 = vmatpush.bf16.msra.mxu0 %v1066
        %1382 = vmatpush.bf16.msra.mxu0 %v1064
        %1383 = vmatpush.bf16.msra.mxu0 %v1062
        %1384 = vmatmul.bf16.gmra.mxu0 %v880
        %v1385 = vpop.f32.mrf.mxu0
        %v1386 = vadd.f32 %v1297, %v1385
        %v1387 = vpop.f32.mrf.mxu0
        %v1388 = vadd.f32 %v1299, %v1387
        %1389 = vmatmul.bf16.gmra.mxu0 %v882
        %v1390 = vpop.f32.mrf.mxu0
        %v1391 = vadd.f32 %v1302, %v1390
        %v1392 = vpop.f32.mrf.mxu0
        %v1393 = vadd.f32 %v1304, %v1392
        %1394 = vmatmul.bf16.gmra.mxu0 %v884
        %v1395 = vpop.f32.mrf.mxu0
        %v1396 = vadd.f32 %v1307, %v1395
        %v1397 = vpop.f32.mrf.mxu0
        %v1398 = vadd.f32 %v1309, %v1397
        %1399 = vmatmul.bf16.gmra.mxu0 %v886
        %v1400 = vpop.f32.mrf.mxu0
        %v1401 = vadd.f32 %v1312, %v1400
        %v1402 = vpop.f32.mrf.mxu0
        %v1403 = vadd.f32 %v1314, %v1402
        %1404 = vmatmul.bf16.gmra.mxu0 %v888
        %v1405 = vpop.f32.mrf.mxu0
        %v1406 = vadd.f32 %v1317, %v1405
        %v1407 = vpop.f32.mrf.mxu0
        %v1408 = vadd.f32 %v1319, %v1407
        %1409 = vmatmul.bf16.gmra.mxu0 %v890
        %v1410 = vpop.f32.mrf.mxu0
        %v1411 = vadd.f32 %v1322, %v1410
        %v1412 = vpop.f32.mrf.mxu0
        %v1413 = vadd.f32 %v1324, %v1412
        %1414 = vmatmul.bf16.gmra.mxu0 %v892
        %v1415 = vpop.f32.mrf.mxu0
        %v1416 = vadd.f32 %v1327, %v1415
        %v1417 = vpop.f32.mrf.mxu0
        %v1418 = vadd.f32 %v1329, %v1417
        %1419 = vmatmul.bf16.gmra.mxu0 %v894
        %v1420 = vpop.f32.mrf.mxu0
        %v1421 = vadd.f32 %v1332, %v1420
        %v1422 = vpop.f32.mrf.mxu0
        %v1423 = vadd.f32 %v1334, %v1422
        %1424 = vmatmul.bf16.gmra.mxu0 %v896
        %v1425 = vpop.f32.mrf.mxu0
        %v1426 = vadd.f32 %v1337, %v1425
        %v1427 = vpop.f32.mrf.mxu0
        %v1428 = vadd.f32 %v1339, %v1427
        %1429 = vmatmul.bf16.gmra.mxu0 %v898
        %v1430 = vpop.f32.mrf.mxu0
        %v1431 = vadd.f32 %v1342, %v1430
        %v1432 = vpop.f32.mrf.mxu0
        %v1433 = vadd.f32 %v1344, %v1432
        %1434 = vmatmul.bf16.gmra.mxu0 %v900
        %v1435 = vpop.f32.mrf.mxu0
        %v1436 = vadd.f32 %v1347, %v1435
        %v1437 = vpop.f32.mrf.mxu0
        %v1438 = vadd.f32 %v1349, %v1437
        %1439 = vmatmul.bf16.gmra.mxu0 %v902
        %v1440 = vpop.f32.mrf.mxu0
        %v1441 = vadd.f32 %v1352, %v1440
        %v1442 = vpop.f32.mrf.mxu0
        %v1443 = vadd.f32 %v1354, %v1442
        %1444 = vmatmul.bf16.gmra.mxu0 %v904
        %v1445 = vpop.f32.mrf.mxu0
        %v1446 = vadd.f32 %v1357, %v1445
        %v1447 = vpop.f32.mrf.mxu0
        %v1448 = vadd.f32 %v1359, %v1447
        %1449 = vmatmul.bf16.gmra.mxu0 %v906
        %v1450 = vpop.f32.mrf.mxu0
        %v1451 = vadd.f32 %v1362, %v1450
        %v1452 = vpop.f32.mrf.mxu0
        %v1453 = vadd.f32 %v1364, %v1452
        %1454 = vmatmul.bf16.gmra.mxu0 %v908
        %v1455 = vpop.f32.mrf.mxu0
        %v1456 = vadd.f32 %v1367, %v1455
        %v1457 = vpop.f32.mrf.mxu0
        %v1458 = vadd.f32 %v1369, %v1457
        %1459 = vmatmul.bf16.gmra.mxu0 %v910
        %v1460 = vpop.f32.mrf.mxu0
        %v1461 = vadd.f32 %v1372, %v1460
        %v1462 = vpop.f32.mrf.mxu0
        %v1463 = vadd.f32 %v1374, %v1462
        %1464 = vdwg.mxu0
        %v1465 = vmax.f32 %v1208, 0.0
        %v1466 = vmax.f32 %v1386, 0.0
        %v1467 = vmax.f32 %v1210, 0.0
        %v1468 = vmax.f32 %v1388, 0.0
        %v1469 = vmax.f32 %v1213, 0.0
        %v1470 = vmax.f32 %v1391, 0.0
        %v1471 = vmax.f32 %v1215, 0.0
        %v1472 = vmax.f32 %v1393, 0.0
        %v1473 = vmax.f32 %v1218, 0.0
        %v1474 = vmax.f32 %v1396, 0.0
        %v1475 = vmax.f32 %v1220, 0.0
        %v1476 = vmax.f32 %v1398, 0.0
        %v1477 = vmax.f32 %v1223, 0.0
        %v1478 = vmax.f32 %v1401, 0.0
        %v1479 = vmax.f32 %v1225, 0.0
        %v1480 = vmax.f32 %v1403, 0.0
        %v1481 = vmax.f32 %v1228, 0.0
        %v1482 = vmax.f32 %v1406, 0.0
        %v1483 = vmax.f32 %v1230, 0.0
        %v1484 = vmax.f32 %v1408, 0.0
        %v1485 = vmax.f32 %v1233, 0.0
        %v1486 = vmax.f32 %v1411, 0.0
        %v1487 = vmax.f32 %v1235, 0.0
        %v1488 = vmax.f32 %v1413, 0.0
        %v1489 = vmax.f32 %v1238, 0.0
        %v1490 = vmax.f32 %v1416, 0.0
        %v1491 = vmax.f32 %v1240, 0.0
        %v1492 = vmax.f32 %v1418, 0.0
        %v1493 = vmax.f32 %v1243, 0.0
        %v1494 = vmax.f32 %v1421, 0.0
        %v1495 = vmax.f32 %v1245, 0.0
        %v1496 = vmax.f32 %v1423, 0.0
        %v1497 = vmax.f32 %v1248, 0.0
        %v1498 = vmax.f32 %v1426, 0.0
        %v1499 = vmax.f32 %v1250, 0.0
        %v1500 = vmax.f32 %v1428, 0.0
        %v1501 = vmax.f32 %v1253, 0.0
        %v1502 = vmax.f32 %v1431, 0.0
        %v1503 = vmax.f32 %v1255, 0.0
        %v1504 = vmax.f32 %v1433, 0.0
        %v1505 = vmax.f32 %v1258, 0.0
        %v1506 = vmax.f32 %v1436, 0.0
        %v1507 = vmax.f32 %v1260, 0.0
        %v1508 = vmax.f32 %v1438, 0.0
        %v1509 = vmax.f32 %v1263, 0.0
        %v1510 = vmax.f32 %v1441, 0.0
        %v1511 = vmax.f32 %v1265, 0.0
        %v1512 = vmax.f32 %v1443, 0.0
        %v1513 = vmax.f32 %v1268, 0.0
        %v1514 = vmax.f32 %v1446, 0.0
        %v1515 = vmax.f32 %v1270, 0.0
        %v1516 = vmax.f32 %v1448, 0.0
        %v1517 = vmax.f32 %v1273, 0.0
        %v1518 = vmax.f32 %v1451, 0.0
        %v1519 = vmax.f32 %v1275, 0.0
        %v1520 = vmax.f32 %v1453, 0.0
        %v1521 = vmax.f32 %v1278, 0.0
        %v1522 = vmax.f32 %v1456, 0.0
        %v1523 = vmax.f32 %v1280, 0.0
        %v1524 = vmax.f32 %v1458, 0.0
        %v1525 = vmax.f32 %v1283, 0.0
        %v1526 = vmax.f32 %v1461, 0.0
        %v1527 = vmax.f32 %v1285, 0.0
        %v1528 = vmax.f32 %v1463, 0.0
        %v1529 = vpack.c.bf16 %v1467, %v1465
        %v1530 = vpack.c.bf16 %v1468, %v1466
        %v1531 = vpack.c.bf16 %v1471, %v1469
        %v1532 = vpack.c.bf16 %v1472, %v1470
        %v1533 = vpack.c.bf16 %v1475, %v1473
        %v1534 = vpack.c.bf16 %v1476, %v1474
        %v1535 = vpack.c.bf16 %v1479, %v1477
        %v1536 = vpack.c.bf16 %v1480, %v1478
        %v1537 = vpack.c.bf16 %v1483, %v1481
        %v1538 = vpack.c.bf16 %v1484, %v1482
        %v1539 = vpack.c.bf16 %v1487, %v1485
        %v1540 = vpack.c.bf16 %v1488, %v1486
        %v1541 = vpack.c.bf16 %v1491, %v1489
        %v1542 = vpack.c.bf16 %v1492, %v1490
        %v1543 = vpack.c.bf16 %v1495, %v1493
        %v1544 = vpack.c.bf16 %v1496, %v1494
        %v1545 = vpack.c.bf16 %v1499, %v1497
        %v1546 = vpack.c.bf16 %v1500, %v1498
        %v1547 = vpack.c.bf16 %v1503, %v1501
        %v1548 = vpack.c.bf16 %v1504, %v1502
        %v1549 = vpack.c.bf16 %v1507, %v1505
        %v1550 = vpack.c.bf16 %v1508, %v1506
        %v1551 = vpack.c.bf16 %v1511, %v1509
        %v1552 = vpack.c.bf16 %v1512, %v1510
        %v1553 = vpack.c.bf16 %v1515, %v1513
        %v1554 = vpack.c.bf16 %v1516, %v1514
        %v1555 = vpack.c.bf16 %v1519, %v1517
        %v1556 = vpack.c.bf16 %v1520, %v1518
        %v1557 = vpack.c.bf16 %v1523, %v1521
        %v1558 = vpack.c.bf16 %v1524, %v1522
        %v1559 = vpack.c.bf16 %v1527, %v1525
        %v1560 = vpack.c.bf16 %v1528, %v1526
        %v1561 = vld [vmem:[%s5] sm:$0xf]
        %v1562 = vld [vmem:[%s5 + $0x4] sm:$0xf]
        %v1563 = vld [vmem:[%s5 + $0x8] sm:$0xf]
        %v1564 = vld [vmem:[%s5 + $0xc] sm:$0xf]
        %v1565 = vld [vmem:[%s5 + $0x10] sm:$0xf]
        %v1566 = vld [vmem:[%s5 + $0x14] sm:$0xf]
        %v1567 = vld [vmem:[%s5 + $0x18] sm:$0xf]
        %v1568 = vld [vmem:[%s5 + $0x1c] sm:$0xf]
        %v1569 = vld [vmem:[%s5 + $0x20] sm:$0xf]
        %v1570 = vld [vmem:[%s5 + $0x24] sm:$0xf]
        %v1571 = vld [vmem:[%s5 + $0x28] sm:$0xf]
        %v1572 = vld [vmem:[%s5 + $0x2c] sm:$0xf]
        %v1573 = vld [vmem:[%s5 + $0x30] sm:$0xf]
        %v1574 = vld [vmem:[%s5 + $0x34] sm:$0xf]
        %v1575 = vld [vmem:[%s5 + $0x38] sm:$0xf]
        %v1576 = vld [vmem:[%s5 + $0x3c] sm:$0xf]
        %v1577 = vld [vmem:[%s5 + $0x40] sm:$0xf]
        %v1578 = vld [vmem:[%s5 + $0x44] sm:$0xf]
        %v1579 = vld [vmem:[%s5 + $0x48] sm:$0xf]
        %v1580 = vld [vmem:[%s5 + $0x4c] sm:$0xf]
        %v1581 = vld [vmem:[%s5 + $0x50] sm:$0xf]
        %v1582 = vld [vmem:[%s5 + $0x54] sm:$0xf]
        %v1583 = vld [vmem:[%s5 + $0x58] sm:$0xf]
        %v1584 = vld [vmem:[%s5 + $0x5c] sm:$0xf]
        %v1585 = vld [vmem:[%s5 + $0x60] sm:$0xf]
        %v1586 = vld [vmem:[%s5 + $0x64] sm:$0xf]
        %v1587 = vld [vmem:[%s5 + $0x68] sm:$0xf]
        %v1588 = vld [vmem:[%s5 + $0x6c] sm:$0xf]
        %v1589 = vld [vmem:[%s5 + $0x70] sm:$0xf]
        %v1590 = vld [vmem:[%s5 + $0x74] sm:$0xf]
        %v1591 = vld [vmem:[%s5 + $0x78] sm:$0xf]
        %v1592 = vld [vmem:[%s5 + $0x7c] sm:$0xf]
        %v1593 = vld [vmem:[%s6] sm:$0x1]
        %v1595 = vperm.slane %v1593, 0
        %v1629 = vunpack.c.l.b16 %v1561
        %v1630 = vunpack.c.l.b16 %v1562
        %v1631 = vunpack.c.l.b16 %v1563
        %v1632 = vunpack.c.l.b16 %v1564
        %v1633 = vunpack.c.l.b16 %v1565
        %v1634 = vunpack.c.l.b16 %v1566
        %v1635 = vunpack.c.l.b16 %v1567
        %v1636 = vunpack.c.l.b16 %v1568
        %v1637 = vunpack.c.l.b16 %v1569
        %v1638 = vunpack.c.l.b16 %v1570
        %v1639 = vunpack.c.l.b16 %v1571
        %v1640 = vunpack.c.l.b16 %v1572
        %v1641 = vunpack.c.l.b16 %v1573
        %v1642 = vunpack.c.l.b16 %v1574
        %v1643 = vunpack.c.l.b16 %v1575
        %v1644 = vunpack.c.l.b16 %v1576
        %v1645 = vunpack.c.l.b16 %v1577
        %v1646 = vunpack.c.l.b16 %v1578
        %v1647 = vunpack.c.l.b16 %v1579
        %v1648 = vunpack.c.l.b16 %v1580
        %v1649 = vunpack.c.l.b16 %v1581
        %v1650 = vunpack.c.l.b16 %v1582
        %v1651 = vunpack.c.l.b16 %v1583
        %v1652 = vunpack.c.l.b16 %v1584
        %v1653 = vunpack.c.l.b16 %v1585
        %v1654 = vunpack.c.l.b16 %v1586
        %v1655 = vunpack.c.l.b16 %v1587
        %v1656 = vunpack.c.l.b16 %v1588
        %v1657 = vunpack.c.l.b16 %v1589
        %v1658 = vunpack.c.l.b16 %v1590
        %v1659 = vunpack.c.l.b16 %v1591
        %v1660 = vunpack.c.l.b16 %v1592
        %v1661 = vpack.c.b16 %v1630, %v1629
        %v1662 = vpack.c.b16 %v1632, %v1631
        %v1663 = vpack.c.b16 %v1634, %v1633
        %v1664 = vpack.c.b16 %v1636, %v1635
        %v1665 = vpack.c.b16 %v1638, %v1637
        %v1666 = vpack.c.b16 %v1640, %v1639
        %v1667 = vpack.c.b16 %v1642, %v1641
        %v1668 = vpack.c.b16 %v1644, %v1643
        %v1669 = vpack.c.b16 %v1646, %v1645
        %v1670 = vpack.c.b16 %v1648, %v1647
        %v1671 = vpack.c.b16 %v1650, %v1649
        %v1672 = vpack.c.b16 %v1652, %v1651
        %v1673 = vpack.c.b16 %v1654, %v1653
        %v1674 = vpack.c.b16 %v1656, %v1655
        %v1675 = vpack.c.b16 %v1658, %v1657
        %v1676 = vpack.c.b16 %v1660, %v1659
        %1693 = vmatpush.bf16.msra.mxu0 %v1668
        %1694 = vmatpush.bf16.msra.mxu0 %v1667
        %1695 = vmatpush.bf16.msra.mxu0 %v1666
        %1696 = vmatpush.bf16.msra.mxu0 %v1665
        %1697 = vmatpush.bf16.msra.mxu0 %v1664
        %1698 = vmatpush.bf16.msra.mxu0 %v1663
        %1699 = vmatpush.bf16.msra.mxu0 %v1662
        %1700 = vmatpush.bf16.msra.mxu0 %v1661
        %1701 = vmatmul.bf16.gmra.mxu0 %v1529
        %v1702 = vpop.f32.mrf.mxu0
        %v1703 = vadd.f32 %v1595, %v1702
        %v1704 = vpop.f32.mrf.mxu0
        %v1705 = vadd.f32 %v1595, %v1704
        %1706 = vmatmul.bf16.gmra.mxu0 %v1531
        %v1707 = vpop.f32.mrf.mxu0
        %v1708 = vadd.f32 %v1595, %v1707
        %v1709 = vpop.f32.mrf.mxu0
        %v1710 = vadd.f32 %v1595, %v1709
        %1711 = vmatmul.bf16.gmra.mxu0 %v1533
        %v1712 = vpop.f32.mrf.mxu0
        %v1713 = vadd.f32 %v1595, %v1712
        %v1714 = vpop.f32.mrf.mxu0
        %v1715 = vadd.f32 %v1595, %v1714
        %1716 = vmatmul.bf16.gmra.mxu0 %v1535
        %v1717 = vpop.f32.mrf.mxu0
        %v1718 = vadd.f32 %v1595, %v1717
        %v1719 = vpop.f32.mrf.mxu0
        %v1720 = vadd.f32 %v1595, %v1719
        %1721 = vmatmul.bf16.gmra.mxu0 %v1537
        %v1722 = vpop.f32.mrf.mxu0
        %v1723 = vadd.f32 %v1595, %v1722
        %v1724 = vpop.f32.mrf.mxu0
        %v1725 = vadd.f32 %v1595, %v1724
        %1726 = vmatmul.bf16.gmra.mxu0 %v1539
        %v1727 = vpop.f32.mrf.mxu0
        %v1728 = vadd.f32 %v1595, %v1727
        %v1729 = vpop.f32.mrf.mxu0
        %v1730 = vadd.f32 %v1595, %v1729
        %1731 = vmatmul.bf16.gmra.mxu0 %v1541
        %v1732 = vpop.f32.mrf.mxu0
        %v1733 = vadd.f32 %v1595, %v1732
        %v1734 = vpop.f32.mrf.mxu0
        %v1735 = vadd.f32 %v1595, %v1734
        %1736 = vmatmul.bf16.gmra.mxu0 %v1543
        %v1737 = vpop.f32.mrf.mxu0
        %v1738 = vadd.f32 %v1595, %v1737
        %v1739 = vpop.f32.mrf.mxu0
        %v1740 = vadd.f32 %v1595, %v1739
        %1741 = vmatmul.bf16.gmra.mxu0 %v1545
        %v1742 = vpop.f32.mrf.mxu0
        %v1743 = vadd.f32 %v1595, %v1742
        %v1744 = vpop.f32.mrf.mxu0
        %v1745 = vadd.f32 %v1595, %v1744
        %1746 = vmatmul.bf16.gmra.mxu0 %v1547
        %v1747 = vpop.f32.mrf.mxu0
        %v1748 = vadd.f32 %v1595, %v1747
        %v1749 = vpop.f32.mrf.mxu0
        %v1750 = vadd.f32 %v1595, %v1749
        %1751 = vmatmul.bf16.gmra.mxu0 %v1549
        %v1752 = vpop.f32.mrf.mxu0
        %v1753 = vadd.f32 %v1595, %v1752
        %v1754 = vpop.f32.mrf.mxu0
        %v1755 = vadd.f32 %v1595, %v1754
        %1756 = vmatmul.bf16.gmra.mxu0 %v1551
        %v1757 = vpop.f32.mrf.mxu0
        %v1758 = vadd.f32 %v1595, %v1757
        %v1759 = vpop.f32.mrf.mxu0
        %v1760 = vadd.f32 %v1595, %v1759
        %1761 = vmatmul.bf16.gmra.mxu0 %v1553
        %v1762 = vpop.f32.mrf.mxu0
        %v1763 = vadd.f32 %v1595, %v1762
        %v1764 = vpop.f32.mrf.mxu0
        %v1765 = vadd.f32 %v1595, %v1764
        %1766 = vmatmul.bf16.gmra.mxu0 %v1555
        %v1767 = vpop.f32.mrf.mxu0
        %v1768 = vadd.f32 %v1595, %v1767
        %v1769 = vpop.f32.mrf.mxu0
        %v1770 = vadd.f32 %v1595, %v1769
        %1771 = vmatmul.bf16.gmra.mxu0 %v1557
        %v1772 = vpop.f32.mrf.mxu0
        %v1773 = vadd.f32 %v1595, %v1772
        %v1774 = vpop.f32.mrf.mxu0
        %v1775 = vadd.f32 %v1595, %v1774
        %1776 = vmatmul.bf16.gmra.mxu0 %v1559
        %v1777 = vpop.f32.mrf.mxu0
        %v1778 = vadd.f32 %v1595, %v1777
        %v1779 = vpop.f32.mrf.mxu0
        %v1780 = vadd.f32 %v1595, %v1779
        %1781 = vdwg.mxu0
        %1782 = vmatpush.bf16.msra.mxu0 %v1676
        %1783 = vmatpush.bf16.msra.mxu0 %v1675
        %1784 = vmatpush.bf16.msra.mxu0 %v1674
        %1785 = vmatpush.bf16.msra.mxu0 %v1673
        %1786 = vmatpush.bf16.msra.mxu0 %v1672
        %1787 = vmatpush.bf16.msra.mxu0 %v1671
        %1788 = vmatpush.bf16.msra.mxu0 %v1670
        %1789 = vmatpush.bf16.msra.mxu0 %v1669
        %1790 = vmatmul.bf16.gmra.mxu0 %v1530
        %v1791 = vpop.f32.mrf.mxu0
        %v1792 = vadd.f32 %v1703, %v1791
        %v1793 = vpop.f32.mrf.mxu0
        %v1794 = vadd.f32 %v1705, %v1793
        %1795 = vmatmul.bf16.gmra.mxu0 %v1532
        %v1796 = vpop.f32.mrf.mxu0
        %v1797 = vadd.f32 %v1708, %v1796
        %v1798 = vpop.f32.mrf.mxu0
        %v1799 = vadd.f32 %v1710, %v1798
        %1800 = vmatmul.bf16.gmra.mxu0 %v1534
        %v1801 = vpop.f32.mrf.mxu0
        %v1802 = vadd.f32 %v1713, %v1801
        %v1803 = vpop.f32.mrf.mxu0
        %v1804 = vadd.f32 %v1715, %v1803
        %1805 = vmatmul.bf16.gmra.mxu0 %v1536
        %v1806 = vpop.f32.mrf.mxu0
        %v1807 = vadd.f32 %v1718, %v1806
        %v1808 = vpop.f32.mrf.mxu0
        %v1809 = vadd.f32 %v1720, %v1808
        %1810 = vmatmul.bf16.gmra.mxu0 %v1538
        %v1811 = vpop.f32.mrf.mxu0
        %v1812 = vadd.f32 %v1723, %v1811
        %v1813 = vpop.f32.mrf.mxu0
        %v1814 = vadd.f32 %v1725, %v1813
        %1815 = vmatmul.bf16.gmra.mxu0 %v1540
        %v1816 = vpop.f32.mrf.mxu0
        %v1817 = vadd.f32 %v1728, %v1816
        %v1818 = vpop.f32.mrf.mxu0
        %v1819 = vadd.f32 %v1730, %v1818
        %1820 = vmatmul.bf16.gmra.mxu0 %v1542
        %v1821 = vpop.f32.mrf.mxu0
        %v1822 = vadd.f32 %v1733, %v1821
        %v1823 = vpop.f32.mrf.mxu0
        %v1824 = vadd.f32 %v1735, %v1823
        %1825 = vmatmul.bf16.gmra.mxu0 %v1544
        %v1826 = vpop.f32.mrf.mxu0
        %v1827 = vadd.f32 %v1738, %v1826
        %v1828 = vpop.f32.mrf.mxu0
        %v1829 = vadd.f32 %v1740, %v1828
        %1830 = vmatmul.bf16.gmra.mxu0 %v1546
        %v1831 = vpop.f32.mrf.mxu0
        %v1832 = vadd.f32 %v1743, %v1831
        %v1833 = vpop.f32.mrf.mxu0
        %v1834 = vadd.f32 %v1745, %v1833
        %1835 = vmatmul.bf16.gmra.mxu0 %v1548
        %v1836 = vpop.f32.mrf.mxu0
        %v1837 = vadd.f32 %v1748, %v1836
        %v1838 = vpop.f32.mrf.mxu0
        %v1839 = vadd.f32 %v1750, %v1838
        %1840 = vmatmul.bf16.gmra.mxu0 %v1550
        %v1841 = vpop.f32.mrf.mxu0
        %v1842 = vadd.f32 %v1753, %v1841
        %v1843 = vpop.f32.mrf.mxu0
        %v1844 = vadd.f32 %v1755, %v1843
        %1845 = vmatmul.bf16.gmra.mxu0 %v1552
        %v1846 = vpop.f32.mrf.mxu0
        %v1847 = vadd.f32 %v1758, %v1846
        %v1848 = vpop.f32.mrf.mxu0
        %v1849 = vadd.f32 %v1760, %v1848
        %1850 = vmatmul.bf16.gmra.mxu0 %v1554
        %v1851 = vpop.f32.mrf.mxu0
        %v1852 = vadd.f32 %v1763, %v1851
        %v1853 = vpop.f32.mrf.mxu0
        %v1854 = vadd.f32 %v1765, %v1853
        %1855 = vmatmul.bf16.gmra.mxu0 %v1556
        %v1856 = vpop.f32.mrf.mxu0
        %v1857 = vadd.f32 %v1768, %v1856
        %v1858 = vpop.f32.mrf.mxu0
        %v1859 = vadd.f32 %v1770, %v1858
        %1860 = vmatmul.bf16.gmra.mxu0 %v1558
        %v1861 = vpop.f32.mrf.mxu0
        %v1862 = vadd.f32 %v1773, %v1861
        %v1863 = vpop.f32.mrf.mxu0
        %v1864 = vadd.f32 %v1775, %v1863
        %1865 = vmatmul.bf16.gmra.mxu0 %v1560
        %v1866 = vpop.f32.mrf.mxu0
        %v1867 = vadd.f32 %v1778, %v1866
        %v1868 = vpop.f32.mrf.mxu0
        %v1869 = vadd.f32 %v1780, %v1868
        %1870 = vdwg.mxu0
        %v1871 = vmax.f32 %v1792, 0.0
        %v1872 = vmax.f32 %v1794, 0.0
        %v1873 = vmax.f32 %v1797, 0.0
        %v1874 = vmax.f32 %v1799, 0.0
        %v1875 = vmax.f32 %v1802, 0.0
        %v1876 = vmax.f32 %v1804, 0.0
        %v1877 = vmax.f32 %v1807, 0.0
        %v1878 = vmax.f32 %v1809, 0.0
        %v1879 = vmax.f32 %v1812, 0.0
        %v1880 = vmax.f32 %v1814, 0.0
        %v1881 = vmax.f32 %v1817, 0.0
        %v1882 = vmax.f32 %v1819, 0.0
        %v1883 = vmax.f32 %v1822, 0.0
        %v1884 = vmax.f32 %v1824, 0.0
        %v1885 = vmax.f32 %v1827, 0.0
        %v1886 = vmax.f32 %v1829, 0.0
        %v1887 = vmax.f32 %v1832, 0.0
        %v1888 = vmax.f32 %v1834, 0.0
        %v1889 = vmax.f32 %v1837, 0.0
        %v1890 = vmax.f32 %v1839, 0.0
        %v1891 = vmax.f32 %v1842, 0.0
        %v1892 = vmax.f32 %v1844, 0.0
        %v1893 = vmax.f32 %v1847, 0.0
        %v1894 = vmax.f32 %v1849, 0.0
        %v1895 = vmax.f32 %v1852, 0.0
        %v1896 = vmax.f32 %v1854, 0.0
        %v1897 = vmax.f32 %v1857, 0.0
        %v1898 = vmax.f32 %v1859, 0.0
        %v1899 = vmax.f32 %v1862, 0.0
        %v1900 = vmax.f32 %v1864, 0.0
        %v1901 = vmax.f32 %v1867, 0.0
        %v1902 = vmax.f32 %v1869, 0.0
        %v1903 = vpack.c.bf16 %v1872, %v1871
        %v1904 = vpack.c.bf16 %v1874, %v1873
        %v1905 = vpack.c.bf16 %v1876, %v1875
        %v1906 = vpack.c.bf16 %v1878, %v1877
        %v1907 = vpack.c.bf16 %v1880, %v1879
        %v1908 = vpack.c.bf16 %v1882, %v1881
        %v1909 = vpack.c.bf16 %v1884, %v1883
        %v1910 = vpack.c.bf16 %v1886, %v1885
        %v1911 = vpack.c.bf16 %v1888, %v1887
        %v1912 = vpack.c.bf16 %v1890, %v1889
        %v1913 = vpack.c.bf16 %v1892, %v1891
        %v1914 = vpack.c.bf16 %v1894, %v1893
        %v1915 = vpack.c.bf16 %v1896, %v1895
        %v1916 = vpack.c.bf16 %v1898, %v1897
        %v1917 = vpack.c.bf16 %v1900, %v1899
        %v1918 = vpack.c.bf16 %v1902, %v1901
        %v1919 = vld [vmem:[%s7] sm:$0xf]
        %v1920 = vld [vmem:[%s7 + $0x4] sm:$0xf]
        %v1921 = vld [vmem:[%s7 + $0x8] sm:$0xf]
        %v1922 = vld [vmem:[%s7 + $0xc] sm:$0xf]
        %v1923 = vld [vmem:[%s7 + $0x10] sm:$0xf]
        %v1924 = vld [vmem:[%s7 + $0x14] sm:$0xf]
        %v1925 = vld [vmem:[%s7 + $0x18] sm:$0xf]
        %v1926 = vld [vmem:[%s7 + $0x1c] sm:$0xf]
        %v1927 = vld [vmem:[%s7 + $0x20] sm:$0xf]
        %v1928 = vld [vmem:[%s7 + $0x24] sm:$0xf]
        %v1929 = vld [vmem:[%s7 + $0x28] sm:$0xf]
        %v1930 = vld [vmem:[%s7 + $0x2c] sm:$0xf]
        %v1931 = vld [vmem:[%s7 + $0x30] sm:$0xf]
        %v1932 = vld [vmem:[%s7 + $0x34] sm:$0xf]
        %v1933 = vld [vmem:[%s7 + $0x38] sm:$0xf]
        %v1934 = vld [vmem:[%s7 + $0x3c] sm:$0xf]
        %v1935 = vld [vmem:[%s8] sm:$0x1]
        %v1937 = vperm.slane %v1935, 0
        %v1955 = vunpack.c.l.b16 %v1919
        %v1956 = vunpack.c.l.b16 %v1920
        %v1957 = vunpack.c.l.b16 %v1921
        %v1958 = vunpack.c.l.b16 %v1922
        %v1959 = vunpack.c.l.b16 %v1923
        %v1960 = vunpack.c.l.b16 %v1924
        %v1961 = vunpack.c.l.b16 %v1925
        %v1962 = vunpack.c.l.b16 %v1926
        %v1963 = vunpack.c.l.b16 %v1927
        %v1964 = vunpack.c.l.b16 %v1928
        %v1965 = vunpack.c.l.b16 %v1929
        %v1966 = vunpack.c.l.b16 %v1930
        %v1967 = vunpack.c.l.b16 %v1931
        %v1968 = vunpack.c.l.b16 %v1932
        %v1969 = vunpack.c.l.b16 %v1933
        %v1970 = vunpack.c.l.b16 %v1934
        %v1971 = vpack.c.b16 %v1956, %v1955
        %v1972 = vpack.c.b16 %v1958, %v1957
        %v1973 = vpack.c.b16 %v1960, %v1959
        %v1974 = vpack.c.b16 %v1962, %v1961
        %v1975 = vpack.c.b16 %v1964, %v1963
        %v1976 = vpack.c.b16 %v1966, %v1965
        %v1977 = vpack.c.b16 %v1968, %v1967
        %v1978 = vpack.c.b16 %v1970, %v1969
        %1987 = vmatpush.bf16.msra.mxu0 %v1978
        %1988 = vmatpush.bf16.msra.mxu0 %v1977
        %1989 = vmatpush.bf16.msra.mxu0 %v1976
        %1990 = vmatpush.bf16.msra.mxu0 %v1975
        %1991 = vmatpush.bf16.msra.mxu0 %v1974
        %1992 = vmatpush.bf16.msra.mxu0 %v1973
        %1993 = vmatpush.bf16.msra.mxu0 %v1972
        %1994 = vmatpush.bf16.msra.mxu0 %v1971
        %1995 = vmatmul.bf16.gmra.mxu0 %v1903
        %v1996 = vpop.f32.mrf.mxu0
        %v1997 = vadd.f32 %v1937, %v1996
        %v1998 = vpop.f32.mrf.mxu0
        %v1999 = vadd.f32 %v1937, %v1998
        %2000 = vmatmul.bf16.gmra.mxu0 %v1904
        %v2001 = vpop.f32.mrf.mxu0
        %v2002 = vadd.f32 %v1937, %v2001
        %v2003 = vpop.f32.mrf.mxu0
        %v2004 = vadd.f32 %v1937, %v2003
        %2005 = vmatmul.bf16.gmra.mxu0 %v1905
        %v2006 = vpop.f32.mrf.mxu0
        %v2007 = vadd.f32 %v1937, %v2006
        %v2008 = vpop.f32.mrf.mxu0
        %v2009 = vadd.f32 %v1937, %v2008
        %2010 = vmatmul.bf16.gmra.mxu0 %v1906
        %v2011 = vpop.f32.mrf.mxu0
        %v2012 = vadd.f32 %v1937, %v2011
        %v2013 = vpop.f32.mrf.mxu0
        %v2014 = vadd.f32 %v1937, %v2013
        %2015 = vmatmul.bf16.gmra.mxu0 %v1907
        %v2016 = vpop.f32.mrf.mxu0
        %v2017 = vadd.f32 %v1937, %v2016
        %v2018 = vpop.f32.mrf.mxu0
        %v2019 = vadd.f32 %v1937, %v2018
        %2020 = vmatmul.bf16.gmra.mxu0 %v1908
        %v2021 = vpop.f32.mrf.mxu0
        %v2022 = vadd.f32 %v1937, %v2021
        %v2023 = vpop.f32.mrf.mxu0
        %v2024 = vadd.f32 %v1937, %v2023
        %2025 = vmatmul.bf16.gmra.mxu0 %v1909
        %v2026 = vpop.f32.mrf.mxu0
        %v2027 = vadd.f32 %v1937, %v2026
        %v2028 = vpop.f32.mrf.mxu0
        %v2029 = vadd.f32 %v1937, %v2028
        %2030 = vmatmul.bf16.gmra.mxu0 %v1910
        %v2031 = vpop.f32.mrf.mxu0
        %v2032 = vadd.f32 %v1937, %v2031
        %v2033 = vpop.f32.mrf.mxu0
        %v2034 = vadd.f32 %v1937, %v2033
        %2035 = vmatmul.bf16.gmra.mxu0 %v1911
        %v2036 = vpop.f32.mrf.mxu0
        %v2037 = vadd.f32 %v1937, %v2036
        %v2038 = vpop.f32.mrf.mxu0
        %v2039 = vadd.f32 %v1937, %v2038
        %2040 = vmatmul.bf16.gmra.mxu0 %v1912
        %v2041 = vpop.f32.mrf.mxu0
        %v2042 = vadd.f32 %v1937, %v2041
        %v2043 = vpop.f32.mrf.mxu0
        %v2044 = vadd.f32 %v1937, %v2043
        %2045 = vmatmul.bf16.gmra.mxu0 %v1913
        %v2046 = vpop.f32.mrf.mxu0
        %v2047 = vadd.f32 %v1937, %v2046
        %v2048 = vpop.f32.mrf.mxu0
        %v2049 = vadd.f32 %v1937, %v2048
        %2050 = vmatmul.bf16.gmra.mxu0 %v1914
        %v2051 = vpop.f32.mrf.mxu0
        %v2052 = vadd.f32 %v1937, %v2051
        %v2053 = vpop.f32.mrf.mxu0
        %v2054 = vadd.f32 %v1937, %v2053
        %2055 = vmatmul.bf16.gmra.mxu0 %v1915
        %v2056 = vpop.f32.mrf.mxu0
        %v2057 = vadd.f32 %v1937, %v2056
        %v2058 = vpop.f32.mrf.mxu0
        %v2059 = vadd.f32 %v1937, %v2058
        %2060 = vmatmul.bf16.gmra.mxu0 %v1916
        %v2061 = vpop.f32.mrf.mxu0
        %v2062 = vadd.f32 %v1937, %v2061
        %v2063 = vpop.f32.mrf.mxu0
        %v2064 = vadd.f32 %v1937, %v2063
        %2065 = vmatmul.bf16.gmra.mxu0 %v1917
        %v2066 = vpop.f32.mrf.mxu0
        %v2067 = vadd.f32 %v1937, %v2066
        %v2068 = vpop.f32.mrf.mxu0
        %v2069 = vadd.f32 %v1937, %v2068
        %2070 = vmatmul.bf16.gmra.mxu0 %v1918
        %v2071 = vpop.f32.mrf.mxu0
        %v2072 = vadd.f32 %v1937, %v2071
        %v2073 = vpop.f32.mrf.mxu0
        %v2074 = vadd.f32 %v1937, %v2073
        %2075 = vdwg.mxu0
        %v2076 = vmax.f32 %v1997, 0.0
        %v2077 = vmax.f32 %v1999, 0.0
        %v2078 = vmax.f32 %v2002, 0.0
        %v2079 = vmax.f32 %v2004, 0.0
        %v2080 = vmax.f32 %v2007, 0.0
        %v2081 = vmax.f32 %v2009, 0.0
        %v2082 = vmax.f32 %v2012, 0.0
        %v2083 = vmax.f32 %v2014, 0.0
        %v2084 = vmax.f32 %v2017, 0.0
        %v2085 = vmax.f32 %v2019, 0.0
        %v2086 = vmax.f32 %v2022, 0.0
        %v2087 = vmax.f32 %v2024, 0.0
        %v2088 = vmax.f32 %v2027, 0.0
        %v2089 = vmax.f32 %v2029, 0.0
        %v2090 = vmax.f32 %v2032, 0.0
        %v2091 = vmax.f32 %v2034, 0.0
        %v2092 = vmax.f32 %v2037, 0.0
        %v2093 = vmax.f32 %v2039, 0.0
        %v2094 = vmax.f32 %v2042, 0.0
        %v2095 = vmax.f32 %v2044, 0.0
        %v2096 = vmax.f32 %v2047, 0.0
        %v2097 = vmax.f32 %v2049, 0.0
        %v2098 = vmax.f32 %v2052, 0.0
        %v2099 = vmax.f32 %v2054, 0.0
        %v2100 = vmax.f32 %v2057, 0.0
        %v2101 = vmax.f32 %v2059, 0.0
        %v2102 = vmax.f32 %v2062, 0.0
        %v2103 = vmax.f32 %v2064, 0.0
        %v2104 = vmax.f32 %v2067, 0.0
        %v2105 = vmax.f32 %v2069, 0.0
        %v2106 = vmax.f32 %v2072, 0.0
        %v2107 = vmax.f32 %v2074, 0.0
        %v2108 = vpack.c.bf16 %v2077, %v2076
        %v2109 = vpack.c.bf16 %v2079, %v2078
        %v2110 = vpack.c.bf16 %v2081, %v2080
        %v2111 = vpack.c.bf16 %v2083, %v2082
        %v2112 = vpack.c.bf16 %v2085, %v2084
        %v2113 = vpack.c.bf16 %v2087, %v2086
        %v2114 = vpack.c.bf16 %v2089, %v2088
        %v2115 = vpack.c.bf16 %v2091, %v2090
        %v2116 = vpack.c.bf16 %v2093, %v2092
        %v2117 = vpack.c.bf16 %v2095, %v2094
        %v2118 = vpack.c.bf16 %v2097, %v2096
        %v2119 = vpack.c.bf16 %v2099, %v2098
        %v2120 = vpack.c.bf16 %v2101, %v2100
        %v2121 = vpack.c.bf16 %v2103, %v2102
        %v2122 = vpack.c.bf16 %v2105, %v2104
        %v2123 = vpack.c.bf16 %v2107, %v2106
        %v2124 = vld [vmem:[%s9] sm:$0x1]
        %v2125 = vld [vmem:[#allocation3] sm:$0x1]
        %2127 = vset.pattern.permute.xlu0 0
        %2128 = vperm.xlu0 %2127, %v2125
        %v2129 = vpop.permute.xlu0 %2128
        %v2131 = vperm.slane %v2129, 0
        %2132 = vmatpush.bf16.xpose.msra.mxu0 %v2115
        %2133 = vmatpush.bf16.xpose.msra.mxu0 %v2114
        %2134 = vmatpush.bf16.xpose.msra.mxu0 %v2113
        %2135 = vmatpush.bf16.xpose.msra.mxu0 %v2112
        %2136 = vmatpush.bf16.xpose.msra.mxu0 %v2111
        %2137 = vmatpush.bf16.xpose.msra.mxu0 %v2110
        %2138 = vmatpush.bf16.xpose.msra.mxu0 %v2109
        %2139 = vmatpush.bf16.xpose.msra.mxu0 %v2108
        %2140 = vmatmul.bf16.gmra.mxu0 %v2124
        %v2141 = vpop.f32.mrf.mxu0
        %v2142 = vadd.f32 %v2131, %v2141
        %v2143 = vpop.f32.mrf.mxu0
        %2144 = vdwg.mxu0
        %2145 = vmatpush.bf16.xpose.msra.mxu0 %v2123
        %2146 = vmatpush.bf16.xpose.msra.mxu0 %v2122
        %2147 = vmatpush.bf16.xpose.msra.mxu0 %v2121
        %2148 = vmatpush.bf16.xpose.msra.mxu0 %v2120
        %2149 = vmatpush.bf16.xpose.msra.mxu0 %v2119
        %2150 = vmatpush.bf16.xpose.msra.mxu0 %v2118
        %2151 = vmatpush.bf16.xpose.msra.mxu0 %v2117
        %2152 = vmatpush.bf16.xpose.msra.mxu0 %v2116
        %2153 = vmatmul.bf16.gmra.mxu0 %v2124
        %v2154 = vpop.f32.mrf.mxu0
        %v2155 = vadd.f32 %v2131, %v2154
        %v2156 = vpop.f32.mrf.mxu0
        %2157 = vdwg.mxu0
        %v2158 = vsub.f32 0.0, %v2142
        %v2159 = vsub.f32 0.0, %v2155
        %v2160 = vmul.f32 %v2158, 1.442695
        %v2161 = vpow.pop %v2160
        %v2162 = vmul.f32 %v2159, 1.442695
        %v2163 = vpow.pop %v2162
        %v2164 = vadd.f32 %v2161, 1.0
        %v2165 = vadd.f32 %v2163, 1.0
        %v2166 = vrcp.pop %v2164
        %v2167 = vmul.f32 %v2164, %v2166
        %v2168 = vsub.f32 1.0, %v2167
        %v2169 = vmul.f32 %v2166, %v2168
        %v2170 = vadd.f32 %v2166, %v2169
        %vm2171 = vweird.f32 %v2164
        %vm2172 = vweird.f32 %v2166
        %vm2173 = vmor %vm2171, %vm2172
        %v2174 = vsel %vm2173, %v2166, %v2170
        %v2175 = vand.u32 2147483647, %v2164
        %vm2176 = vcmp.eq.f32.partialorder %v2175, 8.507059e+37
        %v2177 = vand.u32 %v2164, 2147483648
        %v2178 = vor.u32 1.1754944e-38, %v2177
        %v2179 = vsel %vm2176, %v2178, %v2174
        %v2180 = vmul.f32 1.0, %v2179
        %v2181 = vrcp.pop %v2165
        %v2182 = vmul.f32 %v2165, %v2181
        %v2183 = vsub.f32 1.0, %v2182
        %v2184 = vmul.f32 %v2181, %v2183
        %v2185 = vadd.f32 %v2181, %v2184
        %vm2186 = vweird.f32 %v2165
        %vm2187 = vweird.f32 %v2181
        %vm2188 = vmor %vm2186, %vm2187
        %v2189 = vsel %vm2188, %v2181, %v2185
        %v2190 = vand.u32 2147483647, %v2165
        %vm2191 = vcmp.eq.f32.partialorder %v2190, 8.507059e+37
        %v2192 = vand.u32 %v2165, 2147483648
        %v2193 = vor.u32 1.1754944e-38, %v2192
        %v2194 = vsel %vm2191, %v2193, %v2189
        %v2195 = vmul.f32 1.0, %v2194
        %v2198 = vrot.slane %v2195, 7
        %vm2199 = vcmask 1040384
        %v2200 = vsel %vm2199, %v2180, %v2198
        %v2202 = vlaneseq
        %vm2203 = vcmp.ge.s32.totalorder %v2202, 0
        %vm2204 = vcmp.lt.s32.totalorder %v2202, 256
        %vm2205 = vmand %vm2203, %vm2204
        %2206 = vst.msk [vmem:[%s382] sm:$0x3] %vm2205, %v2200
        %s2207 = sand.u32 %s271, 1
        %s2208 = scalar_lea.sflag [#allocation5], %s2207
        %s2209 = sand.u32 %s271, 1
        %s2210 = smul.addr %s2209, 2
        %s2211 = scalar_lea.vmem [#allocation4], %s2210
        // Predicated region
        $region65: #{net_forward.1} parent=63 // pred_check
          %p2212 = pneg %p281
        $region66: #{net_forward.1} parent=63 // pred_check_branch
          %2214 = sbr.rel (%p2212) target = $region68
        $region67: #{net_forward.1} parent=63 // pred_region
          %2216 = vsyncadd %s2208, 0
          %s2217 = smul.addr %s27, 2
          %s2218 = scalar_lea.hbm %s11, %s2217
          %s2220 = sshll.u32 %s2211, 4
          %s2221 = int_to_ptr.vmem [resolvable:$true] %s2220
          %s2222 = sshll.u32 %s2218, 4
          %s2223 = int_to_ptr.hbm [resolvable:$true] %s2222
          %2225 = dma.vmem_to_hbm [thread:$0]  %s2221, 32, %s2223, %s2208
        $region68: #{net_forward.1} parent=63 // pred_fallthru
          _
      $region64: #{net_forward.1} parent=5 // pred_fallthru
        _
      %p2226 = scmp.le.s32.totalorder 2, %s22
      // Predicated region
      $region69: #{net_forward.1} parent=5 // pred_check
        %p2227 = pneg %p2226
      $region70: #{net_forward.1} parent=5 // pred_check_branch
        %2229 = sbr.rel (%p2227) target = $region72
      $region71: #{net_forward.1} parent=5 // pred_region
        %s2230 = ssub.s32 %s22, 2
        // Predicated region
        $region73: #{net_forward.1} parent=71 // pred_check
          %p2231 = pneg %p287
        $region74: #{net_forward.1} parent=71 // pred_check_branch
          %2233 = sbr.rel (%p2231) target = $region76
        $region75: #{net_forward.1} parent=71 // pred_region
          %s2234 = sand.u32 %s272, 1
          %s2235 = scalar_lea.sflag [#allocation5], %s2234
          %s2236 = sand.u32 %s272, 1
          %s2237 = smul.addr %s2236, 2
          %s2238 = scalar_lea.vmem [#allocation4], %s2237
          %2240 = dma.done %s2235, 32
        $region76: #{net_forward.1} parent=71 // pred_fallthru
          _
      $region72: #{net_forward.1} parent=5 // pred_fallthru
        _
    $region6: #{net_forward.1} parent=1 // loop_footer
      %s26 = sadd.s32 1, %s22
    $region7: #{net_forward.1} parent=1 // loop_footer_branch
      %21 = sbr.rel target = $region3
    $region8: #{net_forward.1} parent=1 // loop_exit
      _
    %2241 = vsyncpa [#allocation5], 1
    %s2242 = scalar_lea.sflag [#allocation5], 1
    %2243 = vsyncpa %s2242, 1

</llo_original>
